<compile_context>
chip_gen: v7x
topology: tpu7x:2x2x1
jax: 0.10.0
libtpu: 0.0.40
codegen_flags: <defaults>
</compile_context>

<pallas_src>
import functools
import math

import jax
import jax.numpy as jnp
from jax.experimental import pallas as pl
from jax.experimental.pallas import tpu as pltpu


def _round_up(n, m):
    return ((n + m - 1) // m) * m


# ---------------------------------------------------------------------------
# Kernel
# ---------------------------------------------------------------------------
def policy_net_kernel(x_ref, w1_ref, w2_ref, bias_ref, out_ref, *,
                      fc1_bf16_epilogue):
    hidden_pad = w1_ref.shape[1]
    act_pad = w2_ref.shape[1]

    x = x_ref[...]                       # (tm, state_dim) f32
    w1 = w1_ref[...]                     # (state_dim, hidden_pad) bf16 (pre-cast)
    w2 = w2_ref[...]                     # (hidden_pad, act_pad)  bf16 (pre-cast)
    b1 = bias_ref[0:1, :hidden_pad]      # (1, hidden_pad) f32
    b2 = bias_ref[1:2, :act_pad]         # (1, act_pad) f32; padded lanes = -1e30

    # fc1: bf16 MXU inputs, f32 accumulation.
    h = jnp.dot(x.astype(w1.dtype), w1, preferred_element_type=jnp.float32)

    if fc1_bf16_epilogue:
        # v6e/v7x (bf16 VPU): bias-add + ReLU in bf16, feeds fc2 directly.
        h2 = jnp.maximum(h.astype(jnp.bfloat16) + b1.astype(jnp.bfloat16), 0.0)
        h2 = h2.astype(w2.dtype)
    else:
        # v5e-safe f32 epilogue; single cast to the fc2 MXU input dtype.
        h2 = jnp.maximum(h + b1, 0.0).astype(w2.dtype)

    # fc2: lane-dense act_pad-wide logits slab (f32).  Padded action lanes get
    # 0 (zero w2 columns) + (-1e30) bias, so no explicit mask is needed.
    logits = jnp.dot(h2, w2, preferred_element_type=jnp.float32) + b2

    # Numerically stable softmax over the last axis; divide via EUP reciprocal.
    m = jnp.max(logits, axis=-1, keepdims=True)
    e = jnp.exp(logits - m)              # padded lanes -> exp(-huge) == 0
    denom = jnp.sum(e, axis=-1, keepdims=True)
    out_ref[...] = (e * pl.reciprocal(denom, approx=True)).astype(out_ref.dtype)


# ---------------------------------------------------------------------------
# Parameter preparation (run ONCE; hoisted out of the forward path)
# ---------------------------------------------------------------------------
def prepare_policy_net_params(w1, b1, w2, b2, *, param_dtype=jnp.bfloat16):
    """Pad output-feature dims to multiples of 128 lanes, cast weights to the
    MXU input dtype, combine the two biases into one (2, W) f32 operand, and
    bake the softmax lane mask (-1e30) into the padded fc2-bias lanes.

    w1: (state_dim, hidden); b1: (hidden,) or (1, hidden)
    w2: (hidden, action_dim); b2: (action_dim,) or (1, action_dim)
    """
    state_dim, hidden = w1.shape
    hidden_w2, action_dim = w2.shape
    assert hidden_w2 == hidden

    hidden_pad = _round_up(hidden, 128)
    act_pad = _round_up(action_dim, 128)
    bias_w = max(hidden_pad, act_pad)

    w1p = jnp.zeros((state_dim, hidden_pad), param_dtype)
    w1p = w1p.at[:, :hidden].set(w1.astype(param_dtype))
    w2p = jnp.zeros((hidden_pad, act_pad), param_dtype)
    w2p = w2p.at[:hidden, :action_dim].set(w2.astype(param_dtype))

    bias = jnp.zeros((2, bias_w), jnp.float32)
    bias = bias.at[0, :hidden].set(jnp.reshape(b1, (hidden,)).astype(jnp.float32))
    # Row 1 = fc2 bias; padded lanes get -1e30 so they never win the softmax
    # max and exp() to exactly 0 -- masking for free, no in-kernel iota/where.
    bias = bias.at[1, :].set(-1e30)
    bias = bias.at[1, :action_dim].set(
        jnp.reshape(b2, (action_dim,)).astype(jnp.float32))

    return dict(w1=w1p, w2=w2p, bias=bias,
                state_dim=state_dim, hidden=hidden, action_dim=action_dim,
                hidden_pad=hidden_pad, act_pad=act_pad)


# ---------------------------------------------------------------------------
# Forward
# ---------------------------------------------------------------------------
def policy_net_forward(x, params, *, block_rows=1024, out_dtype=jnp.float32,
                       fc1_bf16_epilogue=False):
    """x: (B, state_dim) -> (B, action_dim) softmax probabilities (out_dtype)."""
    B, state_dim = x.shape
    assert state_dim == params["state_dim"]
    action_dim = params["action_dim"]
    act_pad = params["act_pad"]
    w1p, w2p, bias = params["w1"], params["w2"], params["bias"]

    x = x.astype(jnp.float32)

    # Row tile: big enough to amortize per-grid-step overhead, multiple of 8,
    # but keep >= 2 grid steps when the batch allows so both v7x TensorCores
    # get work (the batch axis is "parallel").
    B8 = _round_up(B, 8)
    tm = min(block_rows, B8)
    if B8 >= 1024:
        tm = min(tm, _round_up(pl.cdiv(B8, 2), 8))

    grid = (pl.cdiv(B, tm),)   # partial last block handled by Pallas (masked store)

    kernel = functools.partial(policy_net_kernel,
                               fc1_bf16_epilogue=fc1_bf16_epilogue)

    out = pl.pallas_call(
        kernel,
        out_shape=jax.ShapeDtypeStruct((B, act_pad), out_dtype),
        grid_spec=pltpu.PrefetchScalarGridSpec(
            num_scalar_prefetch=0,
            grid=grid,
            in_specs=[
                pl.BlockSpec((tm, state_dim), lambda i: (i, 0)),   # x tile
                pl.BlockSpec(w1p.shape, lambda i: (0, 0)),         # w1 (VMEM resident)
                pl.BlockSpec(w2p.shape, lambda i: (0, 0)),         # w2 (VMEM resident)
                pl.BlockSpec(bias.shape, lambda i: (0, 0)),        # b1|b2 (resident)
            ],
            out_specs=pl.BlockSpec((tm, act_pad), lambda i: (i, 0)),
        ),
        compiler_params=pltpu.CompilerParams(
            dimension_semantics=("parallel",),
        ),
    )(x, w1p, w2p, bias)

    # Lane-dense padded slab -> (B, action_dim).  With out_dtype=bfloat16 this
    # slice reads half the bytes; downstream code may also consume the padded
    # slab directly (padded lanes are exactly 0) to skip the slice entirely.
    return out[:, :action_dim]


def init_linear_params(key, in_features, out_features):
    """PyTorch-style Linear init: U(-1/sqrt(in), 1/sqrt(in)).
    Weight returned already transposed to (in_features, out_features)."""
    kw, kb = jax.random.split(key)
    bound = 1.0 / math.sqrt(in_features)
    w = jax.random.uniform(
        kw, (in_features, out_features), jnp.float32, -bound, bound)
    b = jax.random.uniform(kb, (1, out_features), jnp.float32, -bound, bound)
    return w, b


if __name__ == "__main__":
    # Shapes consistent with the module (hidden_dim=128 as in the script).
    # batch=1024 exercises the tiled batch grid (2 tiles of 512 -> both v7x TCs).
    batch = 1024
    state_dim = 32
    hidden_dim = 128
    action_dim = 16

    key = jax.random.PRNGKey(0)
    kx, k1, k2 = jax.random.split(key, 3)

    x = jax.random.normal(kx, (batch, state_dim), jnp.float32)
    w1, b1 = init_linear_params(k1, state_dim, hidden_dim)
    w2, b2 = init_linear_params(k2, hidden_dim, action_dim)

    # One-time parameter prep (padding + bf16 cast + bias/mask fusion).
    params = prepare_policy_net_params(w1, b1, w2, b2)

    probs = policy_net_forward(x, params)
    probs = jax.block_until_ready(probs)

    # Reference mirroring the kernel's bf16-input / f32-accumulate MXU path.
    h_ref = jnp.maximum(
        jnp.dot(x.astype(jnp.bfloat16), w1.astype(jnp.bfloat16),
                preferred_element_type=jnp.float32) + b1, 0.0)
    logits_ref = jnp.dot(h_ref.astype(jnp.bfloat16), w2.astype(jnp.bfloat16),
                         preferred_element_type=jnp.float32) + b2
    ref = jax.nn.softmax(logits_ref, axis=1)

    assert probs.shape == (batch, action_dim)
    assert jnp.allclose(probs, ref, atol=2e-3), "mismatch vs bf16-matched reference"
    assert jnp.allclose(jnp.sum(probs, axis=1), 1.0, atol=2e-3), "probs don't sum to 1"

    # Sanity vs. pure-f32 reference (bf16 MXU inputs only perturb logits slightly).
    ref_f32 = jax.nn.softmax(jnp.maximum(x @ w1 + b1, 0.0) @ w2 + b2, axis=1)
    assert jnp.allclose(probs, ref_f32, atol=2e-2), "mismatch vs f32 reference"

    # Reduced-store-traffic variant: bf16 output slab (halves output HBM writes).
    probs_bf16 = policy_net_forward(x, params, out_dtype=jnp.bfloat16)
    probs_bf16 = jax.block_until_ready(probs_bf16)
    assert probs_bf16.dtype == jnp.bfloat16
    assert jnp.allclose(probs_bf16.astype(jnp.float32), ref, atol=1e-2), \
        "bf16-output mismatch"

    print("KERNEL_OK")
</pallas_src>

<mosaic_0001>
module attributes {stable_mosaic.version = 11 : i64} {
  func.func @policy_net_kernel(%arg0: i32, %arg1: memref<512x32xf32, #tpu.memory_space<vmem>>, %arg2: memref<32x128xbf16, #tpu.memory_space<vmem>>, %arg3: memref<128x128xbf16, #tpu.memory_space<vmem>>, %arg4: memref<2x128xf32, #tpu.memory_space<vmem>>, %arg5: memref<512x128xf32, #tpu.memory_space<vmem>>) attributes {dimension_semantics = [#tpu.dimension_semantics<parallel>], iteration_bounds = array<i64: 2>, scalar_prefetch = 0 : i64, scratch_operands = 0 : i64, tpu.core_type = #tpu.core_type<tc>, window_params = [{transform_indices = @transform_0, window_bounds = array<i64: 512, 32>}, {pipeline_mode = #tpu.pipeline_mode<synchronous>, transform_indices = @transform_1, window_bounds = array<i64: 32, 128>}, {pipeline_mode = #tpu.pipeline_mode<synchronous>, transform_indices = @transform_2, window_bounds = array<i64: 128, 128>}, {pipeline_mode = #tpu.pipeline_mode<synchronous>, transform_indices = @transform_3, window_bounds = array<i64: 2, 128>}, {transform_indices = @transform_4, window_bounds = array<i64: 512, 128>}]} {
    %c0 = arith.constant 0 : index
    %c0_0 = arith.constant 0 : index
    %0 = vector.load %arg1[%c0, %c0_0] : memref<512x32xf32, #tpu.memory_space<vmem>>, vector<512x32xf32>
    %c0_1 = arith.constant 0 : index
    %c0_2 = arith.constant 0 : index
    %1 = vector.load %arg2[%c0_1, %c0_2] : memref<32x128xbf16, #tpu.memory_space<vmem>>, vector<32x128xbf16>
    %c0_3 = arith.constant 0 : index
    %c0_4 = arith.constant 0 : index
    %2 = vector.load %arg3[%c0_3, %c0_4] : memref<128x128xbf16, #tpu.memory_space<vmem>>, vector<128x128xbf16>
    %c0_5 = arith.constant 0 : index
    %c0_6 = arith.constant 0 : index
    %3 = vector.load %arg4[%c0_5, %c0_6] : memref<2x128xf32, #tpu.memory_space<vmem>>, vector<1x128xf32>
    %c1 = arith.constant 1 : index
    %c0_7 = arith.constant 0 : index
    %4 = vector.load %arg4[%c1, %c0_7] : memref<2x128xf32, #tpu.memory_space<vmem>>, vector<1x128xf32>
    %5 = arith.truncf %0 : vector<512x32xf32> to vector<512x32xbf16>
    %cst = arith.constant dense<0.000000e+00> : vector<512x128xf32>
    %6 = tpu.matmul %5, %1, %cst {dimension_numbers = #tpu.dot_dimension_numbers<[1], [0], [0], [1], [0, 0, 1, 1], [], []>} : vector<512x32xbf16>, vector<32x128xbf16>, vector<512x128xf32> -> vector<512x128xf32>
    %7 = vector.broadcast %3 : vector<1x128xf32> to vector<512x128xf32>
    %8 = arith.addf %6, %7 : vector<512x128xf32>
    %cst_8 = arith.constant 0.000000e+00 : f32
    %9 = vector.broadcast %cst_8 : f32 to vector<512x128xf32>
    %10 = arith.maximumf %8, %9 : vector<512x128xf32>
    %11 = arith.truncf %10 : vector<512x128xf32> to vector<512x128xbf16>
    %cst_9 = arith.constant dense<0.000000e+00> : vector<512x128xf32>
    %12 = tpu.matmul %11, %2, %cst_9 {dimension_numbers = #tpu.dot_dimension_numbers<[1], [0], [0], [1], [0, 0, 1, 1], [], []>} : vector<512x128xbf16>, vector<128x128xbf16>, vector<512x128xf32> -> vector<512x128xf32>
    %13 = vector.broadcast %4 : vector<1x128xf32> to vector<512x128xf32>
    %14 = arith.addf %12, %13 : vector<512x128xf32>
    %cst_10 = arith.constant dense<0xFF800000> : vector<512xf32>
    %15 = vector.multi_reduction <maximumf>, %14, %cst_10 [1] : vector<512x128xf32> to vector<512xf32>
    %16 = vector.shape_cast %15 : vector<512xf32> to vector<512x1xf32>
    %17 = vector.broadcast %16 : vector<512x1xf32> to vector<512x128xf32>
    %18 = arith.subf %14, %17 : vector<512x128xf32>
    %19 = math.exp %18 : vector<512x128xf32>
    %cst_11 = arith.constant dense<0.000000e+00> : vector<512xf32>
    %20 = vector.multi_reduction <add>, %19, %cst_11 [1] : vector<512x128xf32> to vector<512xf32>
    %21 = vector.shape_cast %20 : vector<512xf32> to vector<512x1xf32>
    %22 = tpu.reciprocal %21 {approx = true} : vector<512x1xf32> -> vector<512x1xf32>
    %23 = vector.broadcast %22 : vector<512x1xf32> to vector<512x128xf32>
    %24 = arith.mulf %19, %23 : vector<512x128xf32>
    %c0_12 = arith.constant 0 : index
    %c0_13 = arith.constant 0 : index
    %25 = vector.load %arg5[%c0_12, %c0_13] : memref<512x128xf32, #tpu.memory_space<vmem>>, vector<512x128xf32>
    tpu.vector_store %arg5[%c0_12, %c0_13], %24 {strides = array<i32>} : memref<512x128xf32, #tpu.memory_space<vmem>>, vector<512x128xf32>,
    return
  }
  func.func @transform_0(%arg0: i32) -> (i32, i32) {
    %c0_i32 = arith.constant 0 : i32
    %c0_i32_0 = arith.constant 0 : i32
    return %arg0, %c0_i32 : i32, i32
  }
  func.func @transform_1(%arg0: i32) -> (i32, i32) {
    %c0_i32 = arith.constant 0 : i32
    %c0_i32_0 = arith.constant 0 : i32
    %c0_i32_1 = arith.constant 0 : i32
    return %c0_i32, %c0_i32_0 : i32, i32
  }
  func.func @transform_2(%arg0: i32) -> (i32, i32) {
    %c0_i32 = arith.constant 0 : i32
    %c0_i32_0 = arith.constant 0 : i32
    %c0_i32_1 = arith.constant 0 : i32
    return %c0_i32, %c0_i32_0 : i32, i32
  }
  func.func @transform_3(%arg0: i32) -> (i32, i32) {
    %c0_i32 = arith.constant 0 : i32
    %c0_i32_0 = arith.constant 0 : i32
    %c0_i32_1 = arith.constant 0 : i32
    return %c0_i32, %c0_i32_0 : i32, i32
  }
  func.func @transform_4(%arg0: i32) -> (i32, i32) {
    %c0_i32 = arith.constant 0 : i32
    %c0_i32_0 = arith.constant 0 : i32
    return %arg0, %c0_i32 : i32, i32
  }
}

</mosaic_0001>

<llo_original>
// kernel: tpu_custom_call.1
$region0: #{tpu_custom_call.1}
  #allocation0 [shape = 'u32[]', space=smem, size = 0x4, offset = 0x4, fixed_abs, tag = 'smem constant byte address 0x4 - core index']
  #allocation1 [shape = 'u32[144,128]{1,0:T(1,128)}', space=vmem, size = 0x12000, scoped, tag = 'internal scratch']
  %s0 = inlined_call_operand.vmem [shape: f32[1024,32], index: 0, kind: input, shape index: {}]
  %s1 = inlined_call_operand.vmem [shape: bf16[32,128], index: 1, kind: input, shape index: {}]
  %s2 = inlined_call_operand.vmem [shape: bf16[128,128], index: 2, kind: input, shape index: {}]
  %s3 = inlined_call_operand.vmem [shape: f32[2,128], index: 3, kind: input, shape index: {}]
  %s4 = inlined_call_operand.hbm [shape: f32[1024,128], index: 4, kind: output, shape index: {}]
  %s5 = sld [smem:[#allocation0]]
  $region49: #{tpu_custom_call.1} parent=0
    _
  %s7 = ssub.s32 1, %s5
  %s8 = scalar_select 0, %s7, %s5
  $region1: #{tpu_custom_call.1} parent=0
    #allocation2 [shape = 'u8[524288]{0}', space=vmem, size = 0x80000, scoped, tag = 'output window, operand 0']
    #allocation3 [shape = 's32[2]{0}', space=sflag, size = 0x8, scoped, tag = 'scoped memory for tpu_custom_call.1']
    %9 = vsyncpa [#allocation3], 0
    %s10 = scalar_lea.sflag [#allocation3], 1
    %11 = vsyncpa %s10, 0
    loop: start=0, step=1, limit=4
    $region2: #{tpu_custom_call.1} parent=1 // loop_pre_header
      _
    $region3: #{tpu_custom_call.1} parent=1 // loop_header
      %s13 = sphi 0, %s17
      %p14 = scmp.ge.s32.totalorder %s13, 4
      %s23 = sphi 0, %s25
      %s26 = sphi 0, %s23
      %s27 = sphi 0, %s26
      %s43 = sphi 0, %s27
      %s47 = sphi 0, %s47
      %s49 = sphi 0, %s47
      %s50 = sphi 0, %s49
      %s64 = sphi 0, %s50
      %s68 = sphi 0, %s68
      %s70 = sphi 0, %s68
      %s71 = sphi 0, %s70
      %s85 = sphi 0, %s71
      %s89 = sphi 0, %s89
      %s91 = sphi 0, %s89
      %s92 = sphi 0, %s91
      %s106 = sphi 0, %s92
      %s112 = sphi 0, %s114
      %s115 = sphi 0, %s112
      %s116 = sphi 0, %s115
      %s132 = sphi 0, %s116
    $region4: #{tpu_custom_call.1} parent=1 // loop_header_branch
      %16 = sbr.rel (%p14) target = $region8
    $region5: #{tpu_custom_call.1} parent=1 // loop_body
      %s18 = ssub.s32 %s13, 1
      %s19 = ssub.s32 %s13, 2
      %s20 = sadd.s32 %s13, 1
      %s21 = ssub.s32 %s13, %s20
      %p22 = scmp.eq.s32.totalorder %s21, 0
      %s24 = sadd.s32 %s23, 1
      %s25 = scalar_select %p22, %s23, %s24
      %p28 = pneg %p22
      %p29 = scmp.eq.s32.totalorder %s13, 1
      %p30 = por %p28, %p29
      %p31 = scmp.ne.s32.totalorder %s23, %s26
      %p32 = scmp.eq.s32.totalorder %s13, 0
      %p33 = por %p31, %p32
      %p34 = scmp.ne.s32.totalorder %s23, %s26
      %p35 = scmp.eq.s32.totalorder %s18, 1
      %p36 = por %p34, %p35
      %p37 = scmp.ne.s32.totalorder %s26, %s27
      %p38 = scmp.eq.s32.totalorder %s18, 0
      %p39 = por %p37, %p38
      %p40 = scmp.ne.s32.totalorder %s26, %s27
      %p41 = scmp.eq.s32.totalorder %s19, 1
      %p42 = por %p40, %p41
      %p44 = scmp.ne.s32.totalorder %s27, %s43
      %p45 = scmp.eq.s32.totalorder %s19, 0
      %p46 = por %p44, %p45
      %s48 = sadd.s32 %s47, 1
      %p51 = scmp.eq.s32.totalorder %s13, 1
      %p52 = scmp.ne.s32.totalorder %s47, %s49
      %p53 = scmp.eq.s32.totalorder %s13, 0
      %p54 = por %p52, %p53
      %p55 = scmp.ne.s32.totalorder %s47, %s49
      %p56 = scmp.eq.s32.totalorder %s18, 1
      %p57 = por %p55, %p56
      %p58 = scmp.ne.s32.totalorder %s49, %s50
      %p59 = scmp.eq.s32.totalorder %s18, 0
      %p60 = por %p58, %p59
      %p61 = scmp.ne.s32.totalorder %s49, %s50
      %p62 = scmp.eq.s32.totalorder %s19, 1
      %p63 = por %p61, %p62
      %p65 = scmp.ne.s32.totalorder %s50, %s64
      %p66 = scmp.eq.s32.totalorder %s19, 0
      %p67 = por %p65, %p66
      %s69 = sadd.s32 %s68, 1
      %p72 = scmp.eq.s32.totalorder %s13, 1
      %p73 = scmp.ne.s32.totalorder %s68, %s70
      %p74 = scmp.eq.s32.totalorder %s13, 0
      %p75 = por %p73, %p74
      %p76 = scmp.ne.s32.totalorder %s68, %s70
      %p77 = scmp.eq.s32.totalorder %s18, 1
      %p78 = por %p76, %p77
      %p79 = scmp.ne.s32.totalorder %s70, %s71
      %p80 = scmp.eq.s32.totalorder %s18, 0
      %p81 = por %p79, %p80
      %p82 = scmp.ne.s32.totalorder %s70, %s71
      %p83 = scmp.eq.s32.totalorder %s19, 1
      %p84 = por %p82, %p83
      %p86 = scmp.ne.s32.totalorder %s71, %s85
      %p87 = scmp.eq.s32.totalorder %s19, 0
      %p88 = por %p86, %p87
      %s90 = sadd.s32 %s89, 1
      %p93 = scmp.eq.s32.totalorder %s13, 1
      %p94 = scmp.ne.s32.totalorder %s89, %s91
      %p95 = scmp.eq.s32.totalorder %s13, 0
      %p96 = por %p94, %p95
      %p97 = scmp.ne.s32.totalorder %s89, %s91
      %p98 = scmp.eq.s32.totalorder %s18, 1
      %p99 = por %p97, %p98
      %p100 = scmp.ne.s32.totalorder %s91, %s92
      %p101 = scmp.eq.s32.totalorder %s18, 0
      %p102 = por %p100, %p101
      %p103 = scmp.ne.s32.totalorder %s91, %s92
      %p104 = scmp.eq.s32.totalorder %s19, 1
      %p105 = por %p103, %p104
      %p107 = scmp.ne.s32.totalorder %s92, %s106
      %p108 = scmp.eq.s32.totalorder %s19, 0
      %p109 = por %p107, %p108
      %s110 = ssub.s32 %s13, %s20
      %p111 = scmp.eq.s32.totalorder %s110, 0
      %s113 = sadd.s32 %s112, 1
      %s114 = scalar_select %p111, %s112, %s113
      %p117 = pneg %p111
      %p118 = scmp.eq.s32.totalorder %s13, 1
      %p119 = por %p117, %p118
      %p120 = scmp.ne.s32.totalorder %s112, %s115
      %p121 = scmp.eq.s32.totalorder %s13, 0
      %p122 = por %p120, %p121
      %p123 = scmp.ne.s32.totalorder %s112, %s115
      %p124 = scmp.eq.s32.totalorder %s18, 1
      %p125 = por %p123, %p124
      %p126 = scmp.ne.s32.totalorder %s115, %s116
      %p127 = scmp.eq.s32.totalorder %s18, 0
      %p128 = por %p126, %p127
      %p129 = scmp.ne.s32.totalorder %s115, %s116
      %p130 = scmp.eq.s32.totalorder %s19, 1
      %p131 = por %p129, %p130
      %p133 = scmp.ne.s32.totalorder %s116, %s132
      %p134 = scmp.eq.s32.totalorder %s19, 0
      %p135 = por %p133, %p134
      %p136 = scmp.le.s32.totalorder 1, %s13
      %p137 = scmp.lt.s32.totalorder %s13, 3
      %p138 = pnand %p136, %p137
      %p139 = pneg %p138
      // Predicated region
      $region9: #{tpu_custom_call.1} parent=5 // pred_check
        _
      $region10: #{tpu_custom_call.1} parent=5 // pred_check_branch
        %141 = sbr.rel (%p138) target = $region12
      $region11: #{tpu_custom_call.1} parent=5 // pred_region
        %s142 = ssub.s32 %s13, 1
        // Predicated region
        $region13: #{tpu_custom_call.1} parent=11 // pred_check
          %p143 = pneg %p60
        $region14: #{tpu_custom_call.1} parent=11 // pred_check_branch
          %145 = sbr.rel (%p143) target = $region16
        $region15: #{tpu_custom_call.1} parent=11 // pred_region
          _
        $region16: #{tpu_custom_call.1} parent=11 // pred_fallthru
          _
        // Predicated region
        $region17: #{tpu_custom_call.1} parent=11 // pred_check
          %p146 = pneg %p81
        $region18: #{tpu_custom_call.1} parent=11 // pred_check_branch
          %148 = sbr.rel (%p146) target = $region20
        $region19: #{tpu_custom_call.1} parent=11 // pred_region
          _
        $region20: #{tpu_custom_call.1} parent=11 // pred_fallthru
          _
        // Predicated region
        $region21: #{tpu_custom_call.1} parent=11 // pred_check
          %p149 = pneg %p102
        $region22: #{tpu_custom_call.1} parent=11 // pred_check_branch
          %151 = sbr.rel (%p149) target = $region24
        $region23: #{tpu_custom_call.1} parent=11 // pred_region
          _
        $region24: #{tpu_custom_call.1} parent=11 // pred_fallthru
          _
      $region12: #{tpu_custom_call.1} parent=5 // pred_fallthru
        _
      %p152 = scmp.lt.s32.totalorder %s13, 2
      // Predicated region
      $region25: #{tpu_custom_call.1} parent=5 // pred_check
        %p153 = pneg %p152
      $region26: #{tpu_custom_call.1} parent=5 // pred_check_branch
        %155 = sbr.rel (%p153) target = $region28
      $region27: #{tpu_custom_call.1} parent=5 // pred_region
        // Predicated region
        $region29: #{tpu_custom_call.1} parent=27 // pred_check
          %p156 = pneg %p33
        $region30: #{tpu_custom_call.1} parent=27 // pred_check_branch
          %158 = sbr.rel (%p156) target = $region32
        $region31: #{tpu_custom_call.1} parent=27 // pred_region
          %s159 = smul.u32 64, %s13
          %p160 = scmp.lt.s32.totalorder %s159, 127
          %s161 = scalar_select %p160, %s159, 127
          %s162 = smul.addr %s161, 8
          %s163 = scalar_lea.vmem %s0, %s162
          %s164 = smul.u32 64, %s13
        $region32: #{tpu_custom_call.1} parent=27 // pred_fallthru
          _
      $region28: #{tpu_custom_call.1} parent=5 // pred_fallthru
        _
      %p165 = scmp.le.s32.totalorder 1, %s13
      %p166 = scmp.lt.s32.totalorder %s13, 3
      %p167 = pnand %p165, %p166
      %p168 = pneg %p167
      // Predicated region
      $region33: #{tpu_custom_call.1} parent=5 // pred_check
        _
      $region34: #{tpu_custom_call.1} parent=5 // pred_check_branch
        %170 = sbr.rel (%p167) target = $region36
      $region35: #{tpu_custom_call.1} parent=5 // pred_region
        %s171 = ssub.s32 %s13, 1
        %s172 = smul.u32 64, %s18
        %p173 = scmp.lt.s32.totalorder %s172, 127
        %s174 = scalar_select %p173, %s172, 127
        %s175 = smul.addr %s174, 8
        %s176 = scalar_lea.vmem %s0, %s175
        %p177 = pneg %p39
        %p178 = pneg %p36
        %p179 = pneg %p60
        %p180 = pneg %p57
        %p181 = pneg %p81
        %p182 = pneg %p78
        %p183 = pneg %p102
        %p184 = pneg %p99
        %p185 = pneg %p128
        %p186 = pneg %p125
        %s187 = sand.u32 %s115, 1
        %s188 = scalar_lea.sflag [#allocation3], %s187
        %s189 = sand.u32 %s115, 1
        %s190 = smul.addr %s189, 512
        %s191 = scalar_lea.vmem [#allocation2], %s190
        %s192 = smul.u32 64, %s18
        %p193 = scmp.lt.s32.totalorder %s192, 127
        %s194 = scalar_select %p193, %s192, 127
        %s195 = smul.addr %s194, 8
        %s196 = scalar_lea.vmem %s0, %s195
        %s197 = smul.u32 64, %s18
        %s198 = smul.u32 64, %s18
        %v200 = vld [vmem:[%s196] sm:$0xff]
        %v201 = vld [vmem:[%s196 + $0x8] sm:$0xff]
        %v202 = vld [vmem:[%s196 + $0x10] sm:$0xff]
        %v203 = vld [vmem:[%s196 + $0x18] sm:$0xff]
        %v204 = vld [vmem:[%s196 + $0x20] sm:$0xff]
        %v205 = vld [vmem:[%s196 + $0x28] sm:$0xff]
        %v206 = vld [vmem:[%s196 + $0x30] sm:$0xff]
        %v207 = vld [vmem:[%s196 + $0x38] sm:$0xff]
        %v208 = vld [vmem:[%s196 + $0x40] sm:$0xff]
        %v209 = vld [vmem:[%s196 + $0x48] sm:$0xff]
        %v210 = vld [vmem:[%s196 + $0x50] sm:$0xff]
        %v211 = vld [vmem:[%s196 + $0x58] sm:$0xff]
        %v212 = vld [vmem:[%s196 + $0x60] sm:$0xff]
        %v213 = vld [vmem:[%s196 + $0x68] sm:$0xff]
        %v214 = vld [vmem:[%s196 + $0x70] sm:$0xff]
        %v215 = vld [vmem:[%s196 + $0x78] sm:$0xff]
        %v216 = vld [vmem:[%s196 + $0x80] sm:$0xff]
        %v217 = vld [vmem:[%s196 + $0x88] sm:$0xff]
        %v218 = vld [vmem:[%s196 + $0x90] sm:$0xff]
        %v219 = vld [vmem:[%s196 + $0x98] sm:$0xff]
        %v220 = vld [vmem:[%s196 + $0xa0] sm:$0xff]
        %v221 = vld [vmem:[%s196 + $0xa8] sm:$0xff]
        %v222 = vld [vmem:[%s196 + $0xb0] sm:$0xff]
        %v223 = vld [vmem:[%s196 + $0xb8] sm:$0xff]
        %v224 = vld [vmem:[%s196 + $0xc0] sm:$0xff]
        %v225 = vld [vmem:[%s196 + $0xc8] sm:$0xff]
        %v226 = vld [vmem:[%s196 + $0xd0] sm:$0xff]
        %v227 = vld [vmem:[%s196 + $0xd8] sm:$0xff]
        %v228 = vld [vmem:[%s196 + $0xe0] sm:$0xff]
        %v229 = vld [vmem:[%s196 + $0xe8] sm:$0xff]
        %v230 = vld [vmem:[%s196 + $0xf0] sm:$0xff]
        %v231 = vld [vmem:[%s196 + $0xf8] sm:$0xff]
        %v232 = vld [vmem:[%s196 + $0x100] sm:$0xff]
        %v233 = vld [vmem:[%s196 + $0x108] sm:$0xff]
        %v234 = vld [vmem:[%s196 + $0x110] sm:$0xff]
        %v235 = vld [vmem:[%s196 + $0x118] sm:$0xff]
        %v236 = vld [vmem:[%s196 + $0x120] sm:$0xff]
        %v237 = vld [vmem:[%s196 + $0x128] sm:$0xff]
        %v238 = vld [vmem:[%s196 + $0x130] sm:$0xff]
        %v239 = vld [vmem:[%s196 + $0x138] sm:$0xff]
        %v240 = vld [vmem:[%s196 + $0x140] sm:$0xff]
        %v241 = vld [vmem:[%s196 + $0x148] sm:$0xff]
        %v242 = vld [vmem:[%s196 + $0x150] sm:$0xff]
        %v243 = vld [vmem:[%s196 + $0x158] sm:$0xff]
        %v244 = vld [vmem:[%s196 + $0x160] sm:$0xff]
        %v245 = vld [vmem:[%s196 + $0x168] sm:$0xff]
        %v246 = vld [vmem:[%s196 + $0x170] sm:$0xff]
        %v247 = vld [vmem:[%s196 + $0x178] sm:$0xff]
        %v248 = vld [vmem:[%s196 + $0x180] sm:$0xff]
        %v249 = vld [vmem:[%s196 + $0x188] sm:$0xff]
        %v250 = vld [vmem:[%s196 + $0x190] sm:$0xff]
        %v251 = vld [vmem:[%s196 + $0x198] sm:$0xff]
        %v252 = vld [vmem:[%s196 + $0x1a0] sm:$0xff]
        %v253 = vld [vmem:[%s196 + $0x1a8] sm:$0xff]
        %v254 = vld [vmem:[%s196 + $0x1b0] sm:$0xff]
        %v255 = vld [vmem:[%s196 + $0x1b8] sm:$0xff]
        %v256 = vld [vmem:[%s196 + $0x1c0] sm:$0xff]
        %v257 = vld [vmem:[%s196 + $0x1c8] sm:$0xff]
        %v258 = vld [vmem:[%s196 + $0x1d0] sm:$0xff]
        %v259 = vld [vmem:[%s196 + $0x1d8] sm:$0xff]
        %v260 = vld [vmem:[%s196 + $0x1e0] sm:$0xff]
        %v261 = vld [vmem:[%s196 + $0x1e8] sm:$0xff]
        %v262 = vld [vmem:[%s196 + $0x1f0] sm:$0xff]
        %v263 = vld [vmem:[%s196 + $0x1f8] sm:$0xff]
        %v264 = vld [vmem:[%s1] sm:$0xf]
        %v265 = vld [vmem:[%s1 + $0x4] sm:$0xf]
        %v266 = vld [vmem:[%s1 + $0x8] sm:$0xf]
        %v267 = vld [vmem:[%s1 + $0xc] sm:$0xf]
        %v268 = vld [vmem:[%s2] sm:$0xf]
        %v269 = vld [vmem:[%s2 + $0x4] sm:$0xf]
        %v270 = vld [vmem:[%s2 + $0x8] sm:$0xf]
        %v271 = vld [vmem:[%s2 + $0xc] sm:$0xf]
        %v272 = vld [vmem:[%s2 + $0x10] sm:$0xf]
        %v273 = vld [vmem:[%s2 + $0x14] sm:$0xf]
        %v274 = vld [vmem:[%s2 + $0x18] sm:$0xf]
        %v275 = vld [vmem:[%s2 + $0x1c] sm:$0xf]
        %v276 = vld [vmem:[%s2 + $0x20] sm:$0xf]
        %v277 = vld [vmem:[%s2 + $0x24] sm:$0xf]
        %v278 = vld [vmem:[%s2 + $0x28] sm:$0xf]
        %v279 = vld [vmem:[%s2 + $0x2c] sm:$0xf]
        %v280 = vld [vmem:[%s2 + $0x30] sm:$0xf]
        %v281 = vld [vmem:[%s2 + $0x34] sm:$0xf]
        %v282 = vld [vmem:[%s2 + $0x38] sm:$0xf]
        %v283 = vld [vmem:[%s2 + $0x3c] sm:$0xf]
        %v284 = vld [vmem:[%s3] sm:$0x1]
        %v285 = vld [vmem:[%s3 + $0x1] sm:$0x1]
        %v286 = vpack.c.bf16 %v201, %v200
        %v287 = vpack.c.bf16 %v203, %v202
        %v288 = vpack.c.bf16 %v205, %v204
        %v289 = vpack.c.bf16 %v207, %v206
        %v290 = vpack.c.bf16 %v209, %v208
        %v291 = vpack.c.bf16 %v211, %v210
        %v292 = vpack.c.bf16 %v213, %v212
        %v293 = vpack.c.bf16 %v215, %v214
        %v294 = vpack.c.bf16 %v217, %v216
        %v295 = vpack.c.bf16 %v219, %v218
        %v296 = vpack.c.bf16 %v221, %v220
        %v297 = vpack.c.bf16 %v223, %v222
        %v298 = vpack.c.bf16 %v225, %v224
        %v299 = vpack.c.bf16 %v227, %v226
        %v300 = vpack.c.bf16 %v229, %v228
        %v301 = vpack.c.bf16 %v231, %v230
        %v302 = vpack.c.bf16 %v233, %v232
        %v303 = vpack.c.bf16 %v235, %v234
        %v304 = vpack.c.bf16 %v237, %v236
        %v305 = vpack.c.bf16 %v239, %v238
        %v306 = vpack.c.bf16 %v241, %v240
        %v307 = vpack.c.bf16 %v243, %v242
        %v308 = vpack.c.bf16 %v245, %v244
        %v309 = vpack.c.bf16 %v247, %v246
        %v310 = vpack.c.bf16 %v249, %v248
        %v311 = vpack.c.bf16 %v251, %v250
        %v312 = vpack.c.bf16 %v253, %v252
        %v313 = vpack.c.bf16 %v255, %v254
        %v314 = vpack.c.bf16 %v257, %v256
        %v315 = vpack.c.bf16 %v259, %v258
        %v316 = vpack.c.bf16 %v261, %v260
        %v317 = vpack.c.bf16 %v263, %v262
        %v318 = vlaneseq
        %v319 = vshrl.u32 %v318, 7
        %v320 = vsub.s32 0, %v319
        %v321 = vrot.slane %v284, %v320
        %v326 = vunpack.c.l.b16 %v264
        %v327 = vunpack.c.l.b16 %v265
        %v328 = vunpack.c.l.b16 %v266
        %v329 = vunpack.c.l.b16 %v267
        %v330 = vpack.c.b16 %v327, %v326
        %v331 = vpack.c.b16 %v329, %v328
        %vm334 = vcmask 261120
        %v336 = vsel %vm334, %v286, 0
        %v339 = vsel %vm334, %v287, 0
        %v342 = vsel %vm334, %v288, 0
        %v345 = vsel %vm334, %v289, 0
        %v348 = vsel %vm334, %v290, 0
        %v351 = vsel %vm334, %v291, 0
        %v354 = vsel %vm334, %v292, 0
        %v357 = vsel %vm334, %v293, 0
        %v360 = vsel %vm334, %v294, 0
        %v363 = vsel %vm334, %v295, 0
        %v366 = vsel %vm334, %v296, 0
        %v369 = vsel %vm334, %v297, 0
        %v372 = vsel %vm334, %v298, 0
        %v375 = vsel %vm334, %v299, 0
        %v378 = vsel %vm334, %v300, 0
        %v381 = vsel %vm334, %v301, 0
        %v384 = vsel %vm334, %v302, 0
        %v387 = vsel %vm334, %v303, 0
        %v390 = vsel %vm334, %v304, 0
        %v393 = vsel %vm334, %v305, 0
        %v396 = vsel %vm334, %v306, 0
        %v399 = vsel %vm334, %v307, 0
        %v402 = vsel %vm334, %v308, 0
        %v405 = vsel %vm334, %v309, 0
        %v408 = vsel %vm334, %v310, 0
        %v411 = vsel %vm334, %v311, 0
        %v414 = vsel %vm334, %v312, 0
        %v417 = vsel %vm334, %v313, 0
        %v420 = vsel %vm334, %v314, 0
        %v423 = vsel %vm334, %v315, 0
        %v426 = vsel %vm334, %v316, 0
        %v429 = vsel %vm334, %v317, 0
        %431 = vmatprep.subr.bf16.mxu0 0
        %432 = vmatpush1.bf16.msra.mxu0 %v330
        %433 = vmatprep.subr.bf16.mxu0 0
        %434 = vmatpush1.bf16.msra.mxu0 %v331
        %435 = vmatprep.subr.bf16.mxu0 0
        %436 = vmatpush1.bf16.msra.mxu0 0
        %437 = vmatprep.subr.bf16.mxu0 0
        %438 = vmatpush1.bf16.msra.mxu0 0
        %439 = vmatprep.subr.bf16.mxu0 0
        %440 = vmatpush1.bf16.msra.mxu0 0
        %441 = vmatprep.subr.bf16.mxu0 0
        %442 = vmatpush1.bf16.msra.mxu0 0
        %443 = vmatprep.subr.bf16.mxu0 0
        %444 = vmatpush1.bf16.msra.mxu0 0
        %445 = vmatprep.subr.bf16.mxu0 0
        %446 = vmatpush1.bf16.msra.mxu0 0
        %447 = vmatprep.subr.bf16.mxu0 0
        %448 = vmatpush1.bf16.msra.mxu0 0
        %449 = vmatprep.subr.bf16.mxu0 0
        %450 = vmatpush1.bf16.msra.mxu0 0
        %451 = vmatprep.subr.bf16.mxu0 0
        %452 = vmatpush1.bf16.msra.mxu0 0
        %453 = vmatprep.subr.bf16.mxu0 0
        %454 = vmatpush1.bf16.msra.mxu0 0
        %455 = vmatprep.subr.bf16.mxu0 0
        %456 = vmatpush1.bf16.msra.mxu0 0
        %457 = vmatprep.subr.bf16.mxu0 0
        %458 = vmatpush1.bf16.msra.mxu0 0
        %459 = vmatprep.subr.bf16.mxu0 0
        %460 = vmatpush1.bf16.msra.mxu0 0
        %461 = vmatprep.subr.bf16.mxu0 0
        %462 = vmatpush1.bf16.msra.mxu0 0
        %463 = vmatprep.mubr.bf16.mxu0 0
        %464 = vmatmul.mubr.bf16.gmra.mrb[0].mxu0 %v336
        %v465 = vpop.f32.mrb[0].mxu0
        %v466 = vadd.f32 %v321, %v465
        %v467 = vpop.f32.mrb[0].mxu0
        %v468 = vpop.f32.mrb[0].mxu0
        %v469 = vadd.f32 %v321, %v468
        %v470 = vpop.f32.mrb[0].mxu0
        %471 = vmatprep.mubr.bf16.mxu0 0
        %472 = vmatmul.mubr.bf16.gmra.mrb[0].mxu0 %v339
        %v473 = vpop.f32.mrb[0].mxu0
        %v474 = vadd.f32 %v321, %v473
        %v475 = vpop.f32.mrb[0].mxu0
        %v476 = vpop.f32.mrb[0].mxu0
        %v477 = vadd.f32 %v321, %v476
        %v478 = vpop.f32.mrb[0].mxu0
        %479 = vmatprep.mubr.bf16.mxu0 0
        %480 = vmatmul.mubr.bf16.gmra.mrb[0].mxu0 %v342
        %v481 = vpop.f32.mrb[0].mxu0
        %v482 = vadd.f32 %v321, %v481
        %v483 = vpop.f32.mrb[0].mxu0
        %v484 = vpop.f32.mrb[0].mxu0
        %v485 = vadd.f32 %v321, %v484
        %v486 = vpop.f32.mrb[0].mxu0
        %487 = vmatprep.mubr.bf16.mxu0 0
        %488 = vmatmul.mubr.bf16.gmra.mrb[0].mxu0 %v345
        %v489 = vpop.f32.mrb[0].mxu0
        %v490 = vadd.f32 %v321, %v489
        %v491 = vpop.f32.mrb[0].mxu0
        %v492 = vpop.f32.mrb[0].mxu0
        %v493 = vadd.f32 %v321, %v492
        %v494 = vpop.f32.mrb[0].mxu0
        %495 = vmatprep.mubr.bf16.mxu0 0
        %496 = vmatmul.mubr.bf16.gmra.mrb[0].mxu0 %v348
        %v497 = vpop.f32.mrb[0].mxu0
        %v498 = vadd.f32 %v321, %v497
        %v499 = vpop.f32.mrb[0].mxu0
        %v500 = vpop.f32.mrb[0].mxu0
        %v501 = vadd.f32 %v321, %v500
        %v502 = vpop.f32.mrb[0].mxu0
        %503 = vmatprep.mubr.bf16.mxu0 0
        %504 = vmatmul.mubr.bf16.gmra.mrb[0].mxu0 %v351
        %v505 = vpop.f32.mrb[0].mxu0
        %v506 = vadd.f32 %v321, %v505
        %v507 = vpop.f32.mrb[0].mxu0
        %v508 = vpop.f32.mrb[0].mxu0
        %v509 = vadd.f32 %v321, %v508
        %v510 = vpop.f32.mrb[0].mxu0
        %511 = vmatprep.mubr.bf16.mxu0 0
        %512 = vmatmul.mubr.bf16.gmra.mrb[0].mxu0 %v354
        %v513 = vpop.f32.mrb[0].mxu0
        %v514 = vadd.f32 %v321, %v513
        %v515 = vpop.f32.mrb[0].mxu0
        %v516 = vpop.f32.mrb[0].mxu0
        %v517 = vadd.f32 %v321, %v516
        %v518 = vpop.f32.mrb[0].mxu0
        %519 = vmatprep.mubr.bf16.mxu0 0
        %520 = vmatmul.mubr.bf16.gmra.mrb[0].mxu0 %v357
        %v521 = vpop.f32.mrb[0].mxu0
        %v522 = vadd.f32 %v321, %v521
        %v523 = vpop.f32.mrb[0].mxu0
        %v524 = vpop.f32.mrb[0].mxu0
        %v525 = vadd.f32 %v321, %v524
        %v526 = vpop.f32.mrb[0].mxu0
        %527 = vmatprep.mubr.bf16.mxu0 0
        %528 = vmatmul.mubr.bf16.gmra.mrb[0].mxu0 %v360
        %v529 = vpop.f32.mrb[0].mxu0
        %v530 = vadd.f32 %v321, %v529
        %v531 = vpop.f32.mrb[0].mxu0
        %v532 = vpop.f32.mrb[0].mxu0
        %v533 = vadd.f32 %v321, %v532
        %v534 = vpop.f32.mrb[0].mxu0
        %535 = vmatprep.mubr.bf16.mxu0 0
        %536 = vmatmul.mubr.bf16.gmra.mrb[0].mxu0 %v363
        %v537 = vpop.f32.mrb[0].mxu0
        %v538 = vadd.f32 %v321, %v537
        %v539 = vpop.f32.mrb[0].mxu0
        %v540 = vpop.f32.mrb[0].mxu0
        %v541 = vadd.f32 %v321, %v540
        %v542 = vpop.f32.mrb[0].mxu0
        %543 = vmatprep.mubr.bf16.mxu0 0
        %544 = vmatmul.mubr.bf16.gmra.mrb[0].mxu0 %v366
        %v545 = vpop.f32.mrb[0].mxu0
        %v546 = vadd.f32 %v321, %v545
        %v547 = vpop.f32.mrb[0].mxu0
        %v548 = vpop.f32.mrb[0].mxu0
        %v549 = vadd.f32 %v321, %v548
        %v550 = vpop.f32.mrb[0].mxu0
        %551 = vmatprep.mubr.bf16.mxu0 0
        %552 = vmatmul.mubr.bf16.gmra.mrb[0].mxu0 %v369
        %v553 = vpop.f32.mrb[0].mxu0
        %v554 = vadd.f32 %v321, %v553
        %v555 = vpop.f32.mrb[0].mxu0
        %v556 = vpop.f32.mrb[0].mxu0
        %v557 = vadd.f32 %v321, %v556
        %v558 = vpop.f32.mrb[0].mxu0
        %559 = vmatprep.mubr.bf16.mxu0 0
        %560 = vmatmul.mubr.bf16.gmra.mrb[0].mxu0 %v372
        %v561 = vpop.f32.mrb[0].mxu0
        %v562 = vadd.f32 %v321, %v561
        %v563 = vpop.f32.mrb[0].mxu0
        %v564 = vpop.f32.mrb[0].mxu0
        %v565 = vadd.f32 %v321, %v564
        %v566 = vpop.f32.mrb[0].mxu0
        %567 = vmatprep.mubr.bf16.mxu0 0
        %568 = vmatmul.mubr.bf16.gmra.mrb[0].mxu0 %v375
        %v569 = vpop.f32.mrb[0].mxu0
        %v570 = vadd.f32 %v321, %v569
        %v571 = vpop.f32.mrb[0].mxu0
        %v572 = vpop.f32.mrb[0].mxu0
        %v573 = vadd.f32 %v321, %v572
        %v574 = vpop.f32.mrb[0].mxu0
        %575 = vmatprep.mubr.bf16.mxu0 0
        %576 = vmatmul.mubr.bf16.gmra.mrb[0].mxu0 %v378
        %v577 = vpop.f32.mrb[0].mxu0
        %v578 = vadd.f32 %v321, %v577
        %v579 = vpop.f32.mrb[0].mxu0
        %v580 = vpop.f32.mrb[0].mxu0
        %v581 = vadd.f32 %v321, %v580
        %v582 = vpop.f32.mrb[0].mxu0
        %583 = vmatprep.mubr.bf16.mxu0 0
        %584 = vmatmul.mubr.bf16.gmra.mrb[0].mxu0 %v381
        %v585 = vpop.f32.mrb[0].mxu0
        %v586 = vadd.f32 %v321, %v585
        %v587 = vpop.f32.mrb[0].mxu0
        %v588 = vpop.f32.mrb[0].mxu0
        %v589 = vadd.f32 %v321, %v588
        %v590 = vpop.f32.mrb[0].mxu0
        %591 = vmatprep.mubr.bf16.mxu0 0
        %592 = vmatmul.mubr.bf16.gmra.mrb[0].mxu0 %v384
        %v593 = vpop.f32.mrb[0].mxu0
        %v594 = vadd.f32 %v321, %v593
        %v595 = vpop.f32.mrb[0].mxu0
        %v596 = vpop.f32.mrb[0].mxu0
        %v597 = vadd.f32 %v321, %v596
        %v598 = vpop.f32.mrb[0].mxu0
        %599 = vmatprep.mubr.bf16.mxu0 0
        %600 = vmatmul.mubr.bf16.gmra.mrb[0].mxu0 %v387
        %v601 = vpop.f32.mrb[0].mxu0
        %v602 = vadd.f32 %v321, %v601
        %v603 = vpop.f32.mrb[0].mxu0
        %v604 = vpop.f32.mrb[0].mxu0
        %v605 = vadd.f32 %v321, %v604
        %v606 = vpop.f32.mrb[0].mxu0
        %607 = vmatprep.mubr.bf16.mxu0 0
        %608 = vmatmul.mubr.bf16.gmra.mrb[0].mxu0 %v390
        %v609 = vpop.f32.mrb[0].mxu0
        %v610 = vadd.f32 %v321, %v609
        %v611 = vpop.f32.mrb[0].mxu0
        %v612 = vpop.f32.mrb[0].mxu0
        %v613 = vadd.f32 %v321, %v612
        %v614 = vpop.f32.mrb[0].mxu0
        %615 = vmatprep.mubr.bf16.mxu0 0
        %616 = vmatmul.mubr.bf16.gmra.mrb[0].mxu0 %v393
        %v617 = vpop.f32.mrb[0].mxu0
        %v618 = vadd.f32 %v321, %v617
        %v619 = vpop.f32.mrb[0].mxu0
        %v620 = vpop.f32.mrb[0].mxu0
        %v621 = vadd.f32 %v321, %v620
        %v622 = vpop.f32.mrb[0].mxu0
        %623 = vmatprep.mubr.bf16.mxu0 0
        %624 = vmatmul.mubr.bf16.gmra.mrb[0].mxu0 %v396
        %v625 = vpop.f32.mrb[0].mxu0
        %v626 = vadd.f32 %v321, %v625
        %v627 = vpop.f32.mrb[0].mxu0
        %v628 = vpop.f32.mrb[0].mxu0
        %v629 = vadd.f32 %v321, %v628
        %v630 = vpop.f32.mrb[0].mxu0
        %631 = vmatprep.mubr.bf16.mxu0 0
        %632 = vmatmul.mubr.bf16.gmra.mrb[0].mxu0 %v399
        %v633 = vpop.f32.mrb[0].mxu0
        %v634 = vadd.f32 %v321, %v633
        %v635 = vpop.f32.mrb[0].mxu0
        %v636 = vpop.f32.mrb[0].mxu0
        %v637 = vadd.f32 %v321, %v636
        %v638 = vpop.f32.mrb[0].mxu0
        %639 = vmatprep.mubr.bf16.mxu0 0
        %640 = vmatmul.mubr.bf16.gmra.mrb[0].mxu0 %v402
        %v641 = vpop.f32.mrb[0].mxu0
        %v642 = vadd.f32 %v321, %v641
        %v643 = vpop.f32.mrb[0].mxu0
        %v644 = vpop.f32.mrb[0].mxu0
        %v645 = vadd.f32 %v321, %v644
        %v646 = vpop.f32.mrb[0].mxu0
        %647 = vmatprep.mubr.bf16.mxu0 0
        %648 = vmatmul.mubr.bf16.gmra.mrb[0].mxu0 %v405
        %v649 = vpop.f32.mrb[0].mxu0
        %v650 = vadd.f32 %v321, %v649
        %v651 = vpop.f32.mrb[0].mxu0
        %v652 = vpop.f32.mrb[0].mxu0
        %v653 = vadd.f32 %v321, %v652
        %v654 = vpop.f32.mrb[0].mxu0
        %655 = vmatprep.mubr.bf16.mxu0 0
        %656 = vmatmul.mubr.bf16.gmra.mrb[0].mxu0 %v408
        %v657 = vpop.f32.mrb[0].mxu0
        %v658 = vadd.f32 %v321, %v657
        %v659 = vpop.f32.mrb[0].mxu0
        %v660 = vpop.f32.mrb[0].mxu0
        %v661 = vadd.f32 %v321, %v660
        %v662 = vpop.f32.mrb[0].mxu0
        %663 = vmatprep.mubr.bf16.mxu0 0
        %664 = vmatmul.mubr.bf16.gmra.mrb[0].mxu0 %v411
        %v665 = vpop.f32.mrb[0].mxu0
        %v666 = vadd.f32 %v321, %v665
        %v667 = vpop.f32.mrb[0].mxu0
        %v668 = vpop.f32.mrb[0].mxu0
        %v669 = vadd.f32 %v321, %v668
        %v670 = vpop.f32.mrb[0].mxu0
        %671 = vmatprep.mubr.bf16.mxu0 0
        %672 = vmatmul.mubr.bf16.gmra.mrb[0].mxu0 %v414
        %v673 = vpop.f32.mrb[0].mxu0
        %v674 = vadd.f32 %v321, %v673
        %v675 = vpop.f32.mrb[0].mxu0
        %v676 = vpop.f32.mrb[0].mxu0
        %v677 = vadd.f32 %v321, %v676
        %v678 = vpop.f32.mrb[0].mxu0
        %679 = vmatprep.mubr.bf16.mxu0 0
        %680 = vmatmul.mubr.bf16.gmra.mrb[0].mxu0 %v417
        %v681 = vpop.f32.mrb[0].mxu0
        %v682 = vadd.f32 %v321, %v681
        %v683 = vpop.f32.mrb[0].mxu0
        %v684 = vpop.f32.mrb[0].mxu0
        %v685 = vadd.f32 %v321, %v684
        %v686 = vpop.f32.mrb[0].mxu0
        %687 = vmatprep.mubr.bf16.mxu0 0
        %688 = vmatmul.mubr.bf16.gmra.mrb[0].mxu0 %v420
        %v689 = vpop.f32.mrb[0].mxu0
        %v690 = vadd.f32 %v321, %v689
        %v691 = vpop.f32.mrb[0].mxu0
        %v692 = vpop.f32.mrb[0].mxu0
        %v693 = vadd.f32 %v321, %v692
        %v694 = vpop.f32.mrb[0].mxu0
        %695 = vmatprep.mubr.bf16.mxu0 0
        %696 = vmatmul.mubr.bf16.gmra.mrb[0].mxu0 %v423
        %v697 = vpop.f32.mrb[0].mxu0
        %v698 = vadd.f32 %v321, %v697
        %v699 = vpop.f32.mrb[0].mxu0
        %v700 = vpop.f32.mrb[0].mxu0
        %v701 = vadd.f32 %v321, %v700
        %v702 = vpop.f32.mrb[0].mxu0
        %703 = vmatprep.mubr.bf16.mxu0 0
        %704 = vmatmul.mubr.bf16.gmra.mrb[0].mxu0 %v426
        %v705 = vpop.f32.mrb[0].mxu0
        %v706 = vadd.f32 %v321, %v705
        %v707 = vpop.f32.mrb[0].mxu0
        %v708 = vpop.f32.mrb[0].mxu0
        %v709 = vadd.f32 %v321, %v708
        %v710 = vpop.f32.mrb[0].mxu0
        %711 = vmatprep.mubr.bf16.mxu0 0
        %712 = vmatmul.mubr.bf16.gmra.mrb[0].mxu0 %v429
        %v713 = vpop.f32.mrb[0].mxu0
        %v714 = vadd.f32 %v321, %v713
        %v715 = vpop.f32.mrb[0].mxu0
        %v716 = vpop.f32.mrb[0].mxu0
        %v717 = vadd.f32 %v321, %v716
        %v718 = vpop.f32.mrb[0].mxu0
        %719 = vdwg.mxu0
        %v720 = vmax.f32 %v466, 0.0
        %v721 = vmax.f32 %v469, 0.0
        %v722 = vmax.f32 %v474, 0.0
        %v723 = vmax.f32 %v477, 0.0
        %v724 = vmax.f32 %v482, 0.0
        %v725 = vmax.f32 %v485, 0.0
        %v726 = vmax.f32 %v490, 0.0
        %v727 = vmax.f32 %v493, 0.0
        %v728 = vmax.f32 %v498, 0.0
        %v729 = vmax.f32 %v501, 0.0
        %v730 = vmax.f32 %v506, 0.0
        %v731 = vmax.f32 %v509, 0.0
        %v732 = vmax.f32 %v514, 0.0
        %v733 = vmax.f32 %v517, 0.0
        %v734 = vmax.f32 %v522, 0.0
        %v735 = vmax.f32 %v525, 0.0
        %v736 = vmax.f32 %v530, 0.0
        %v737 = vmax.f32 %v533, 0.0
        %v738 = vmax.f32 %v538, 0.0
        %v739 = vmax.f32 %v541, 0.0
        %v740 = vmax.f32 %v546, 0.0
        %v741 = vmax.f32 %v549, 0.0
        %v742 = vmax.f32 %v554, 0.0
        %v743 = vmax.f32 %v557, 0.0
        %v744 = vmax.f32 %v562, 0.0
        %v745 = vmax.f32 %v565, 0.0
        %v746 = vmax.f32 %v570, 0.0
        %v747 = vmax.f32 %v573, 0.0
        %v748 = vmax.f32 %v578, 0.0
        %v749 = vmax.f32 %v581, 0.0
        %v750 = vmax.f32 %v586, 0.0
        %v751 = vmax.f32 %v589, 0.0
        %v752 = vmax.f32 %v594, 0.0
        %v753 = vmax.f32 %v597, 0.0
        %v754 = vmax.f32 %v602, 0.0
        %v755 = vmax.f32 %v605, 0.0
        %v756 = vmax.f32 %v610, 0.0
        %v757 = vmax.f32 %v613, 0.0
        %v758 = vmax.f32 %v618, 0.0
        %v759 = vmax.f32 %v621, 0.0
        %v760 = vmax.f32 %v626, 0.0
        %v761 = vmax.f32 %v629, 0.0
        %v762 = vmax.f32 %v634, 0.0
        %v763 = vmax.f32 %v637, 0.0
        %v764 = vmax.f32 %v642, 0.0
        %v765 = vmax.f32 %v645, 0.0
        %v766 = vmax.f32 %v650, 0.0
        %v767 = vmax.f32 %v653, 0.0
        %v768 = vmax.f32 %v658, 0.0
        %v769 = vmax.f32 %v661, 0.0
        %v770 = vmax.f32 %v666, 0.0
        %v771 = vmax.f32 %v669, 0.0
        %v772 = vmax.f32 %v674, 0.0
        %v773 = vmax.f32 %v677, 0.0
        %v774 = vmax.f32 %v682, 0.0
        %v775 = vmax.f32 %v685, 0.0
        %v776 = vmax.f32 %v690, 0.0
        %v777 = vmax.f32 %v693, 0.0
        %v778 = vmax.f32 %v698, 0.0
        %v779 = vmax.f32 %v701, 0.0
        %v780 = vmax.f32 %v706, 0.0
        %v781 = vmax.f32 %v709, 0.0
        %v782 = vmax.f32 %v714, 0.0
        %v783 = vmax.f32 %v717, 0.0
        %v784 = vpack.c.bf16 %v721, %v720
        %v785 = vpack.c.bf16 %v723, %v722
        %v786 = vpack.c.bf16 %v725, %v724
        %v787 = vpack.c.bf16 %v727, %v726
        %v788 = vpack.c.bf16 %v729, %v728
        %v789 = vpack.c.bf16 %v731, %v730
        %v790 = vpack.c.bf16 %v733, %v732
        %v791 = vpack.c.bf16 %v735, %v734
        %v792 = vpack.c.bf16 %v737, %v736
        %v793 = vpack.c.bf16 %v739, %v738
        %v794 = vpack.c.bf16 %v741, %v740
        %v795 = vpack.c.bf16 %v743, %v742
        %v796 = vpack.c.bf16 %v745, %v744
        %v797 = vpack.c.bf16 %v747, %v746
        %v798 = vpack.c.bf16 %v749, %v748
        %v799 = vpack.c.bf16 %v751, %v750
        %v800 = vpack.c.bf16 %v753, %v752
        %v801 = vpack.c.bf16 %v755, %v754
        %v802 = vpack.c.bf16 %v757, %v756
        %v803 = vpack.c.bf16 %v759, %v758
        %v804 = vpack.c.bf16 %v761, %v760
        %v805 = vpack.c.bf16 %v763, %v762
        %v806 = vpack.c.bf16 %v765, %v764
        %v807 = vpack.c.bf16 %v767, %v766
        %v808 = vpack.c.bf16 %v769, %v768
        %v809 = vpack.c.bf16 %v771, %v770
        %v810 = vpack.c.bf16 %v773, %v772
        %v811 = vpack.c.bf16 %v775, %v774
        %v812 = vpack.c.bf16 %v777, %v776
        %v813 = vpack.c.bf16 %v779, %v778
        %v814 = vpack.c.bf16 %v781, %v780
        %v815 = vpack.c.bf16 %v783, %v782
        %v816 = vlaneseq
        %v817 = vshrl.u32 %v816, 7
        %v818 = vsub.s32 0, %v817
        %v819 = vrot.slane %v285, %v818
        %v836 = vunpack.c.l.b16 %v268
        %v837 = vunpack.c.l.b16 %v269
        %v838 = vunpack.c.l.b16 %v270
        %v839 = vunpack.c.l.b16 %v271
        %v840 = vunpack.c.l.b16 %v272
        %v841 = vunpack.c.l.b16 %v273
        %v842 = vunpack.c.l.b16 %v274
        %v843 = vunpack.c.l.b16 %v275
        %v844 = vunpack.c.l.b16 %v276
        %v845 = vunpack.c.l.b16 %v277
        %v846 = vunpack.c.l.b16 %v278
        %v847 = vunpack.c.l.b16 %v279
        %v848 = vunpack.c.l.b16 %v280
        %v849 = vunpack.c.l.b16 %v281
        %v850 = vunpack.c.l.b16 %v282
        %v851 = vunpack.c.l.b16 %v283
        %v852 = vpack.c.b16 %v837, %v836
        %v853 = vpack.c.b16 %v839, %v838
        %v854 = vpack.c.b16 %v841, %v840
        %v855 = vpack.c.b16 %v843, %v842
        %v856 = vpack.c.b16 %v845, %v844
        %v857 = vpack.c.b16 %v847, %v846
        %v858 = vpack.c.b16 %v849, %v848
        %v859 = vpack.c.b16 %v851, %v850
        %868 = vmatprep.subr.bf16.mxu0 0
        %869 = vmatpush1.bf16.msra.mxu0 %v852
        %870 = vmatprep.subr.bf16.mxu0 0
        %871 = vmatpush1.bf16.msra.mxu0 %v853
        %872 = vmatprep.subr.bf16.mxu0 0
        %873 = vmatpush1.bf16.msra.mxu0 %v854
        %874 = vmatprep.subr.bf16.mxu0 0
        %875 = vmatpush1.bf16.msra.mxu0 %v855
        %876 = vmatprep.subr.bf16.mxu0 0
        %877 = vmatpush1.bf16.msra.mxu0 %v856
        %878 = vmatprep.subr.bf16.mxu0 0
        %879 = vmatpush1.bf16.msra.mxu0 %v857
        %880 = vmatprep.subr.bf16.mxu0 0
        %881 = vmatpush1.bf16.msra.mxu0 %v858
        %882 = vmatprep.subr.bf16.mxu0 0
        %883 = vmatpush1.bf16.msra.mxu0 %v859
        %884 = vmatprep.subr.bf16.mxu0 0
        %885 = vmatpush1.bf16.msra.mxu0 0
        %886 = vmatprep.subr.bf16.mxu0 0
        %887 = vmatpush1.bf16.msra.mxu0 0
        %888 = vmatprep.subr.bf16.mxu0 0
        %889 = vmatpush1.bf16.msra.mxu0 0
        %890 = vmatprep.subr.bf16.mxu0 0
        %891 = vmatpush1.bf16.msra.mxu0 0
        %892 = vmatprep.subr.bf16.mxu0 0
        %893 = vmatpush1.bf16.msra.mxu0 0
        %894 = vmatprep.subr.bf16.mxu0 0
        %895 = vmatpush1.bf16.msra.mxu0 0
        %896 = vmatprep.subr.bf16.mxu0 0
        %897 = vmatpush1.bf16.msra.mxu0 0
        %898 = vmatprep.subr.bf16.mxu0 0
        %899 = vmatpush1.bf16.msra.mxu0 0
        %900 = vmatprep.mubr.bf16.mxu0 0
        %901 = vmatmul.mubr.bf16.gmra.mrb[0].mxu0 %v784
        %v902 = vpop.f32.mrb[0].mxu0
        %v903 = vadd.f32 %v819, %v902
        %v904 = vpop.f32.mrb[0].mxu0
        %v905 = vpop.f32.mrb[0].mxu0
        %v906 = vadd.f32 %v819, %v905
        %v907 = vpop.f32.mrb[0].mxu0
        %908 = vmatprep.mubr.bf16.mxu0 0
        %909 = vmatmul.mubr.bf16.gmra.mrb[0].mxu0 %v785
        %v910 = vpop.f32.mrb[0].mxu0
        %v911 = vadd.f32 %v819, %v910
        %v912 = vpop.f32.mrb[0].mxu0
        %v913 = vpop.f32.mrb[0].mxu0
        %v914 = vadd.f32 %v819, %v913
        %v915 = vpop.f32.mrb[0].mxu0
        %916 = vmatprep.mubr.bf16.mxu0 0
        %917 = vmatmul.mubr.bf16.gmra.mrb[0].mxu0 %v786
        %v918 = vpop.f32.mrb[0].mxu0
        %v919 = vadd.f32 %v819, %v918
        %v920 = vpop.f32.mrb[0].mxu0
        %v921 = vpop.f32.mrb[0].mxu0
        %v922 = vadd.f32 %v819, %v921
        %v923 = vpop.f32.mrb[0].mxu0
        %924 = vmatprep.mubr.bf16.mxu0 0
        %925 = vmatmul.mubr.bf16.gmra.mrb[0].mxu0 %v787
        %v926 = vpop.f32.mrb[0].mxu0
        %v927 = vadd.f32 %v819, %v926
        %v928 = vpop.f32.mrb[0].mxu0
        %v929 = vpop.f32.mrb[0].mxu0
        %v930 = vadd.f32 %v819, %v929
        %v931 = vpop.f32.mrb[0].mxu0
        %932 = vmatprep.mubr.bf16.mxu0 0
        %933 = vmatmul.mubr.bf16.gmra.mrb[0].mxu0 %v788
        %v934 = vpop.f32.mrb[0].mxu0
        %v935 = vadd.f32 %v819, %v934
        %v936 = vpop.f32.mrb[0].mxu0
        %v937 = vpop.f32.mrb[0].mxu0
        %v938 = vadd.f32 %v819, %v937
        %v939 = vpop.f32.mrb[0].mxu0
        %940 = vmatprep.mubr.bf16.mxu0 0
        %941 = vmatmul.mubr.bf16.gmra.mrb[0].mxu0 %v789
        %v942 = vpop.f32.mrb[0].mxu0
        %v943 = vadd.f32 %v819, %v942
        %v944 = vpop.f32.mrb[0].mxu0
        %v945 = vpop.f32.mrb[0].mxu0
        %v946 = vadd.f32 %v819, %v945
        %v947 = vpop.f32.mrb[0].mxu0
        %948 = vmatprep.mubr.bf16.mxu0 0
        %949 = vmatmul.mubr.bf16.gmra.mrb[0].mxu0 %v790
        %v950 = vpop.f32.mrb[0].mxu0
        %v951 = vadd.f32 %v819, %v950
        %v952 = vpop.f32.mrb[0].mxu0
        %v953 = vpop.f32.mrb[0].mxu0
        %v954 = vadd.f32 %v819, %v953
        %v955 = vpop.f32.mrb[0].mxu0
        %956 = vmatprep.mubr.bf16.mxu0 0
        %957 = vmatmul.mubr.bf16.gmra.mrb[0].mxu0 %v791
        %v958 = vpop.f32.mrb[0].mxu0
        %v959 = vadd.f32 %v819, %v958
        %v960 = vpop.f32.mrb[0].mxu0
        %v961 = vpop.f32.mrb[0].mxu0
        %v962 = vadd.f32 %v819, %v961
        %v963 = vpop.f32.mrb[0].mxu0
        %964 = vmatprep.mubr.bf16.mxu0 0
        %965 = vmatmul.mubr.bf16.gmra.mrb[0].mxu0 %v792
        %v966 = vpop.f32.mrb[0].mxu0
        %v967 = vadd.f32 %v819, %v966
        %v968 = vpop.f32.mrb[0].mxu0
        %v969 = vpop.f32.mrb[0].mxu0
        %v970 = vadd.f32 %v819, %v969
        %v971 = vpop.f32.mrb[0].mxu0
        %972 = vmatprep.mubr.bf16.mxu0 0
        %973 = vmatmul.mubr.bf16.gmra.mrb[0].mxu0 %v793
        %v974 = vpop.f32.mrb[0].mxu0
        %v975 = vadd.f32 %v819, %v974
        %v976 = vpop.f32.mrb[0].mxu0
        %v977 = vpop.f32.mrb[0].mxu0
        %v978 = vadd.f32 %v819, %v977
        %v979 = vpop.f32.mrb[0].mxu0
        %980 = vmatprep.mubr.bf16.mxu0 0
        %981 = vmatmul.mubr.bf16.gmra.mrb[0].mxu0 %v794
        %v982 = vpop.f32.mrb[0].mxu0
        %v983 = vadd.f32 %v819, %v982
        %v984 = vpop.f32.mrb[0].mxu0
        %v985 = vpop.f32.mrb[0].mxu0
        %v986 = vadd.f32 %v819, %v985
        %v987 = vpop.f32.mrb[0].mxu0
        %988 = vmatprep.mubr.bf16.mxu0 0
        %989 = vmatmul.mubr.bf16.gmra.mrb[0].mxu0 %v795
        %v990 = vpop.f32.mrb[0].mxu0
        %v991 = vadd.f32 %v819, %v990
        %v992 = vpop.f32.mrb[0].mxu0
        %v993 = vpop.f32.mrb[0].mxu0
        %v994 = vadd.f32 %v819, %v993
        %v995 = vpop.f32.mrb[0].mxu0
        %996 = vmatprep.mubr.bf16.mxu0 0
        %997 = vmatmul.mubr.bf16.gmra.mrb[0].mxu0 %v796
        %v998 = vpop.f32.mrb[0].mxu0
        %v999 = vadd.f32 %v819, %v998
        %v1000 = vpop.f32.mrb[0].mxu0
        %v1001 = vpop.f32.mrb[0].mxu0
        %v1002 = vadd.f32 %v819, %v1001
        %v1003 = vpop.f32.mrb[0].mxu0
        %1004 = vmatprep.mubr.bf16.mxu0 0
        %1005 = vmatmul.mubr.bf16.gmra.mrb[0].mxu0 %v797
        %v1006 = vpop.f32.mrb[0].mxu0
        %v1007 = vadd.f32 %v819, %v1006
        %v1008 = vpop.f32.mrb[0].mxu0
        %v1009 = vpop.f32.mrb[0].mxu0
        %v1010 = vadd.f32 %v819, %v1009
        %v1011 = vpop.f32.mrb[0].mxu0
        %1012 = vmatprep.mubr.bf16.mxu0 0
        %1013 = vmatmul.mubr.bf16.gmra.mrb[0].mxu0 %v798
        %v1014 = vpop.f32.mrb[0].mxu0
        %v1015 = vadd.f32 %v819, %v1014
        %v1016 = vpop.f32.mrb[0].mxu0
        %v1017 = vpop.f32.mrb[0].mxu0
        %v1018 = vadd.f32 %v819, %v1017
        %v1019 = vpop.f32.mrb[0].mxu0
        %1020 = vmatprep.mubr.bf16.mxu0 0
        %1021 = vmatmul.mubr.bf16.gmra.mrb[0].mxu0 %v799
        %v1022 = vpop.f32.mrb[0].mxu0
        %v1023 = vadd.f32 %v819, %v1022
        %v1024 = vpop.f32.mrb[0].mxu0
        %v1025 = vpop.f32.mrb[0].mxu0
        %v1026 = vadd.f32 %v819, %v1025
        %v1027 = vpop.f32.mrb[0].mxu0
        %1028 = vmatprep.mubr.bf16.mxu0 0
        %1029 = vmatmul.mubr.bf16.gmra.mrb[0].mxu0 %v800
        %v1030 = vpop.f32.mrb[0].mxu0
        %v1031 = vadd.f32 %v819, %v1030
        %v1032 = vpop.f32.mrb[0].mxu0
        %v1033 = vpop.f32.mrb[0].mxu0
        %v1034 = vadd.f32 %v819, %v1033
        %v1035 = vpop.f32.mrb[0].mxu0
        %1036 = vmatprep.mubr.bf16.mxu0 0
        %1037 = vmatmul.mubr.bf16.gmra.mrb[0].mxu0 %v801
        %v1038 = vpop.f32.mrb[0].mxu0
        %v1039 = vadd.f32 %v819, %v1038
        %v1040 = vpop.f32.mrb[0].mxu0
        %v1041 = vpop.f32.mrb[0].mxu0
        %v1042 = vadd.f32 %v819, %v1041
        %v1043 = vpop.f32.mrb[0].mxu0
        %1044 = vmatprep.mubr.bf16.mxu0 0
        %1045 = vmatmul.mubr.bf16.gmra.mrb[0].mxu0 %v802
        %v1046 = vpop.f32.mrb[0].mxu0
        %v1047 = vadd.f32 %v819, %v1046
        %v1048 = vpop.f32.mrb[0].mxu0
        %v1049 = vpop.f32.mrb[0].mxu0
        %v1050 = vadd.f32 %v819, %v1049
        %v1051 = vpop.f32.mrb[0].mxu0
        %1052 = vmatprep.mubr.bf16.mxu0 0
        %1053 = vmatmul.mubr.bf16.gmra.mrb[0].mxu0 %v803
        %v1054 = vpop.f32.mrb[0].mxu0
        %v1055 = vadd.f32 %v819, %v1054
        %v1056 = vpop.f32.mrb[0].mxu0
        %v1057 = vpop.f32.mrb[0].mxu0
        %v1058 = vadd.f32 %v819, %v1057
        %v1059 = vpop.f32.mrb[0].mxu0
        %1060 = vmatprep.mubr.bf16.mxu0 0
        %1061 = vmatmul.mubr.bf16.gmra.mrb[0].mxu0 %v804
        %v1062 = vpop.f32.mrb[0].mxu0
        %v1063 = vadd.f32 %v819, %v1062
        %v1064 = vpop.f32.mrb[0].mxu0
        %v1065 = vpop.f32.mrb[0].mxu0
        %v1066 = vadd.f32 %v819, %v1065
        %v1067 = vpop.f32.mrb[0].mxu0
        %1068 = vmatprep.mubr.bf16.mxu0 0
        %1069 = vmatmul.mubr.bf16.gmra.mrb[0].mxu0 %v805
        %v1070 = vpop.f32.mrb[0].mxu0
        %v1071 = vadd.f32 %v819, %v1070
        %v1072 = vpop.f32.mrb[0].mxu0
        %v1073 = vpop.f32.mrb[0].mxu0
        %v1074 = vadd.f32 %v819, %v1073
        %v1075 = vpop.f32.mrb[0].mxu0
        %1076 = vmatprep.mubr.bf16.mxu0 0
        %1077 = vmatmul.mubr.bf16.gmra.mrb[0].mxu0 %v806
        %v1078 = vpop.f32.mrb[0].mxu0
        %v1079 = vadd.f32 %v819, %v1078
        %v1080 = vpop.f32.mrb[0].mxu0
        %v1081 = vpop.f32.mrb[0].mxu0
        %v1082 = vadd.f32 %v819, %v1081
        %v1083 = vpop.f32.mrb[0].mxu0
        %1084 = vmatprep.mubr.bf16.mxu0 0
        %1085 = vmatmul.mubr.bf16.gmra.mrb[0].mxu0 %v807
        %v1086 = vpop.f32.mrb[0].mxu0
        %v1087 = vadd.f32 %v819, %v1086
        %v1088 = vpop.f32.mrb[0].mxu0
        %v1089 = vpop.f32.mrb[0].mxu0
        %v1090 = vadd.f32 %v819, %v1089
        %v1091 = vpop.f32.mrb[0].mxu0
        %1092 = vmatprep.mubr.bf16.mxu0 0
        %1093 = vmatmul.mubr.bf16.gmra.mrb[0].mxu0 %v808
        %v1094 = vpop.f32.mrb[0].mxu0
        %v1095 = vadd.f32 %v819, %v1094
        %v1096 = vpop.f32.mrb[0].mxu0
        %v1097 = vpop.f32.mrb[0].mxu0
        %v1098 = vadd.f32 %v819, %v1097
        %v1099 = vpop.f32.mrb[0].mxu0
        %1100 = vmatprep.mubr.bf16.mxu0 0
        %1101 = vmatmul.mubr.bf16.gmra.mrb[0].mxu0 %v809
        %v1102 = vpop.f32.mrb[0].mxu0
        %v1103 = vadd.f32 %v819, %v1102
        %v1104 = vpop.f32.mrb[0].mxu0
        %v1105 = vpop.f32.mrb[0].mxu0
        %v1106 = vadd.f32 %v819, %v1105
        %v1107 = vpop.f32.mrb[0].mxu0
        %1108 = vmatprep.mubr.bf16.mxu0 0
        %1109 = vmatmul.mubr.bf16.gmra.mrb[0].mxu0 %v810
        %v1110 = vpop.f32.mrb[0].mxu0
        %v1111 = vadd.f32 %v819, %v1110
        %v1112 = vpop.f32.mrb[0].mxu0
        %v1113 = vpop.f32.mrb[0].mxu0
        %v1114 = vadd.f32 %v819, %v1113
        %v1115 = vpop.f32.mrb[0].mxu0
        %1116 = vmatprep.mubr.bf16.mxu0 0
        %1117 = vmatmul.mubr.bf16.gmra.mrb[0].mxu0 %v811
        %v1118 = vpop.f32.mrb[0].mxu0
        %v1119 = vadd.f32 %v819, %v1118
        %v1120 = vpop.f32.mrb[0].mxu0
        %v1121 = vpop.f32.mrb[0].mxu0
        %v1122 = vadd.f32 %v819, %v1121
        %v1123 = vpop.f32.mrb[0].mxu0
        %1124 = vmatprep.mubr.bf16.mxu0 0
        %1125 = vmatmul.mubr.bf16.gmra.mrb[0].mxu0 %v812
        %v1126 = vpop.f32.mrb[0].mxu0
        %v1127 = vadd.f32 %v819, %v1126
        %v1128 = vpop.f32.mrb[0].mxu0
        %v1129 = vpop.f32.mrb[0].mxu0
        %v1130 = vadd.f32 %v819, %v1129
        %v1131 = vpop.f32.mrb[0].mxu0
        %1132 = vmatprep.mubr.bf16.mxu0 0
        %1133 = vmatmul.mubr.bf16.gmra.mrb[0].mxu0 %v813
        %v1134 = vpop.f32.mrb[0].mxu0
        %v1135 = vadd.f32 %v819, %v1134
        %v1136 = vpop.f32.mrb[0].mxu0
        %v1137 = vpop.f32.mrb[0].mxu0
        %v1138 = vadd.f32 %v819, %v1137
        %v1139 = vpop.f32.mrb[0].mxu0
        %1140 = vmatprep.mubr.bf16.mxu0 0
        %1141 = vmatmul.mubr.bf16.gmra.mrb[0].mxu0 %v814
        %v1142 = vpop.f32.mrb[0].mxu0
        %v1143 = vadd.f32 %v819, %v1142
        %v1144 = vpop.f32.mrb[0].mxu0
        %v1145 = vpop.f32.mrb[0].mxu0
        %v1146 = vadd.f32 %v819, %v1145
        %v1147 = vpop.f32.mrb[0].mxu0
        %1148 = vmatprep.mubr.bf16.mxu0 0
        %1149 = vmatmul.mubr.bf16.gmra.mrb[0].mxu0 %v815
        %v1150 = vpop.f32.mrb[0].mxu0
        %v1151 = vadd.f32 %v819, %v1150
        %v1152 = vpop.f32.mrb[0].mxu0
        %v1153 = vpop.f32.mrb[0].mxu0
        %v1154 = vadd.f32 %v819, %v1153
        %v1155 = vpop.f32.mrb[0].mxu0
        %1156 = vdwg.mxu0
        %1157 = vmax.xlane.f32.xlu0 %v903
        %v1158 = vpop.xlane.xlu0 %1157
        %1159 = vmax.xlane.f32.xlu0 %v906
        %v1160 = vpop.xlane.xlu0 %1159
        %1161 = vmax.xlane.f32.xlu0 %v911
        %v1162 = vpop.xlane.xlu0 %1161
        %1163 = vmax.xlane.f32.xlu0 %v914
        %v1164 = vpop.xlane.xlu0 %1163
        %1165 = vmax.xlane.f32.xlu0 %v919
        %v1166 = vpop.xlane.xlu0 %1165
        %1167 = vmax.xlane.f32.xlu0 %v922
        %v1168 = vpop.xlane.xlu0 %1167
        %1169 = vmax.xlane.f32.xlu0 %v927
        %v1170 = vpop.xlane.xlu0 %1169
        %1171 = vmax.xlane.f32.xlu0 %v930
        %v1172 = vpop.xlane.xlu0 %1171
        %1173 = vmax.xlane.f32.xlu0 %v935
        %v1174 = vpop.xlane.xlu0 %1173
        %1175 = vmax.xlane.f32.xlu0 %v938
        %v1176 = vpop.xlane.xlu0 %1175
        %1177 = vmax.xlane.f32.xlu0 %v943
        %v1178 = vpop.xlane.xlu0 %1177
        %1179 = vmax.xlane.f32.xlu0 %v946
        %v1180 = vpop.xlane.xlu0 %1179
        %1181 = vmax.xlane.f32.xlu0 %v951
        %v1182 = vpop.xlane.xlu0 %1181
        %1183 = vmax.xlane.f32.xlu0 %v954
        %v1184 = vpop.xlane.xlu0 %1183
        %1185 = vmax.xlane.f32.xlu0 %v959
        %v1186 = vpop.xlane.xlu0 %1185
        %1187 = vmax.xlane.f32.xlu0 %v962
        %v1188 = vpop.xlane.xlu0 %1187
        %1189 = vmax.xlane.f32.xlu0 %v967
        %v1190 = vpop.xlane.xlu0 %1189
        %1191 = vmax.xlane.f32.xlu0 %v970
        %v1192 = vpop.xlane.xlu0 %1191
        %1193 = vmax.xlane.f32.xlu0 %v975
        %v1194 = vpop.xlane.xlu0 %1193
        %1195 = vmax.xlane.f32.xlu0 %v978
        %v1196 = vpop.xlane.xlu0 %1195
        %1197 = vmax.xlane.f32.xlu0 %v983
        %v1198 = vpop.xlane.xlu0 %1197
        %1199 = vmax.xlane.f32.xlu0 %v986
        %v1200 = vpop.xlane.xlu0 %1199
        %1201 = vmax.xlane.f32.xlu0 %v991
        %v1202 = vpop.xlane.xlu0 %1201
        %1203 = vmax.xlane.f32.xlu0 %v994
        %v1204 = vpop.xlane.xlu0 %1203
        %1205 = vmax.xlane.f32.xlu0 %v999
        %v1206 = vpop.xlane.xlu0 %1205
        %1207 = vmax.xlane.f32.xlu0 %v1002
        %v1208 = vpop.xlane.xlu0 %1207
        %1209 = vmax.xlane.f32.xlu0 %v1007
        %v1210 = vpop.xlane.xlu0 %1209
        %1211 = vmax.xlane.f32.xlu0 %v1010
        %v1212 = vpop.xlane.xlu0 %1211
        %1213 = vmax.xlane.f32.xlu0 %v1015
        %v1214 = vpop.xlane.xlu0 %1213
        %1215 = vmax.xlane.f32.xlu0 %v1018
        %v1216 = vpop.xlane.xlu0 %1215
        %1217 = vmax.xlane.f32.xlu0 %v1023
        %v1218 = vpop.xlane.xlu0 %1217
        %1219 = vmax.xlane.f32.xlu0 %v1026
        %v1220 = vpop.xlane.xlu0 %1219
        %1221 = vmax.xlane.f32.xlu0 %v1031
        %v1222 = vpop.xlane.xlu0 %1221
        %1223 = vmax.xlane.f32.xlu0 %v1034
        %v1224 = vpop.xlane.xlu0 %1223
        %1225 = vmax.xlane.f32.xlu0 %v1039
        %v1226 = vpop.xlane.xlu0 %1225
        %1227 = vmax.xlane.f32.xlu0 %v1042
        %v1228 = vpop.xlane.xlu0 %1227
        %1229 = vmax.xlane.f32.xlu0 %v1047
        %v1230 = vpop.xlane.xlu0 %1229
        %1231 = vmax.xlane.f32.xlu0 %v1050
        %v1232 = vpop.xlane.xlu0 %1231
        %1233 = vmax.xlane.f32.xlu0 %v1055
        %v1234 = vpop.xlane.xlu0 %1233
        %1235 = vmax.xlane.f32.xlu0 %v1058
        %v1236 = vpop.xlane.xlu0 %1235
        %1237 = vmax.xlane.f32.xlu0 %v1063
        %v1238 = vpop.xlane.xlu0 %1237
        %1239 = vmax.xlane.f32.xlu0 %v1066
        %v1240 = vpop.xlane.xlu0 %1239
        %1241 = vmax.xlane.f32.xlu0 %v1071
        %v1242 = vpop.xlane.xlu0 %1241
        %1243 = vmax.xlane.f32.xlu0 %v1074
        %v1244 = vpop.xlane.xlu0 %1243
        %1245 = vmax.xlane.f32.xlu0 %v1079
        %v1246 = vpop.xlane.xlu0 %1245
        %1247 = vmax.xlane.f32.xlu0 %v1082
        %v1248 = vpop.xlane.xlu0 %1247
        %1249 = vmax.xlane.f32.xlu0 %v1087
        %v1250 = vpop.xlane.xlu0 %1249
        %1251 = vmax.xlane.f32.xlu0 %v1090
        %v1252 = vpop.xlane.xlu0 %1251
        %1253 = vmax.xlane.f32.xlu0 %v1095
        %v1254 = vpop.xlane.xlu0 %1253
        %1255 = vmax.xlane.f32.xlu0 %v1098
        %v1256 = vpop.xlane.xlu0 %1255
        %1257 = vmax.xlane.f32.xlu0 %v1103
        %v1258 = vpop.xlane.xlu0 %1257
        %1259 = vmax.xlane.f32.xlu0 %v1106
        %v1260 = vpop.xlane.xlu0 %1259
        %1261 = vmax.xlane.f32.xlu0 %v1111
        %v1262 = vpop.xlane.xlu0 %1261
        %1263 = vmax.xlane.f32.xlu0 %v1114
        %v1264 = vpop.xlane.xlu0 %1263
        %1265 = vmax.xlane.f32.xlu0 %v1119
        %v1266 = vpop.xlane.xlu0 %1265
        %1267 = vmax.xlane.f32.xlu0 %v1122
        %v1268 = vpop.xlane.xlu0 %1267
        %1269 = vmax.xlane.f32.xlu0 %v1127
        %v1270 = vpop.xlane.xlu0 %1269
        %1271 = vmax.xlane.f32.xlu0 %v1130
        %v1272 = vpop.xlane.xlu0 %1271
        %1273 = vmax.xlane.f32.xlu0 %v1135
        %v1274 = vpop.xlane.xlu0 %1273
        %1275 = vmax.xlane.f32.xlu0 %v1138
        %v1276 = vpop.xlane.xlu0 %1275
        %1277 = vmax.xlane.f32.xlu0 %v1143
        %v1278 = vpop.xlane.xlu0 %1277
        %1279 = vmax.xlane.f32.xlu0 %v1146
        %v1280 = vpop.xlane.xlu0 %1279
        %1281 = vmax.xlane.f32.xlu0 %v1151
        %v1282 = vpop.xlane.xlu0 %1281
        %1283 = vmax.xlane.f32.xlu0 %v1154
        %v1284 = vpop.xlane.xlu0 %1283
        %v1285 = vsub.f32 %v903, %v1158
        %v1286 = vsub.f32 %v906, %v1160
        %v1287 = vsub.f32 %v911, %v1162
        %v1288 = vsub.f32 %v914, %v1164
        %v1289 = vsub.f32 %v919, %v1166
        %v1290 = vsub.f32 %v922, %v1168
        %v1291 = vsub.f32 %v927, %v1170
        %v1292 = vsub.f32 %v930, %v1172
        %v1293 = vsub.f32 %v935, %v1174
        %v1294 = vsub.f32 %v938, %v1176
        %v1295 = vsub.f32 %v943, %v1178
        %v1296 = vsub.f32 %v946, %v1180
        %v1297 = vsub.f32 %v951, %v1182
        %v1298 = vsub.f32 %v954, %v1184
        %v1299 = vsub.f32 %v959, %v1186
        %v1300 = vsub.f32 %v962, %v1188
        %v1301 = vsub.f32 %v967, %v1190
        %v1302 = vsub.f32 %v970, %v1192
        %v1303 = vsub.f32 %v975, %v1194
        %v1304 = vsub.f32 %v978, %v1196
        %v1305 = vsub.f32 %v983, %v1198
        %v1306 = vsub.f32 %v986, %v1200
        %v1307 = vsub.f32 %v991, %v1202
        %v1308 = vsub.f32 %v994, %v1204
        %v1309 = vsub.f32 %v999, %v1206
        %v1310 = vsub.f32 %v1002, %v1208
        %v1311 = vsub.f32 %v1007, %v1210
        %v1312 = vsub.f32 %v1010, %v1212
        %v1313 = vsub.f32 %v1015, %v1214
        %v1314 = vsub.f32 %v1018, %v1216
        %v1315 = vsub.f32 %v1023, %v1218
        %v1316 = vsub.f32 %v1026, %v1220
        %v1317 = vsub.f32 %v1031, %v1222
        %v1318 = vsub.f32 %v1034, %v1224
        %v1319 = vsub.f32 %v1039, %v1226
        %v1320 = vsub.f32 %v1042, %v1228
        %v1321 = vsub.f32 %v1047, %v1230
        %v1322 = vsub.f32 %v1050, %v1232
        %v1323 = vsub.f32 %v1055, %v1234
        %v1324 = vsub.f32 %v1058, %v1236
        %v1325 = vsub.f32 %v1063, %v1238
        %v1326 = vsub.f32 %v1066, %v1240
        %v1327 = vsub.f32 %v1071, %v1242
        %v1328 = vsub.f32 %v1074, %v1244
        %v1329 = vsub.f32 %v1079, %v1246
        %v1330 = vsub.f32 %v1082, %v1248
        %v1331 = vsub.f32 %v1087, %v1250
        %v1332 = vsub.f32 %v1090, %v1252
        %v1333 = vsub.f32 %v1095, %v1254
        %v1334 = vsub.f32 %v1098, %v1256
        %v1335 = vsub.f32 %v1103, %v1258
        %v1336 = vsub.f32 %v1106, %v1260
        %v1337 = vsub.f32 %v1111, %v1262
        %v1338 = vsub.f32 %v1114, %v1264
        %v1339 = vsub.f32 %v1119, %v1266
        %v1340 = vsub.f32 %v1122, %v1268
        %v1341 = vsub.f32 %v1127, %v1270
        %v1342 = vsub.f32 %v1130, %v1272
        %v1343 = vsub.f32 %v1135, %v1274
        %v1344 = vsub.f32 %v1138, %v1276
        %v1345 = vsub.f32 %v1143, %v1278
        %v1346 = vsub.f32 %v1146, %v1280
        %v1347 = vsub.f32 %v1151, %v1282
        %v1348 = vsub.f32 %v1154, %v1284
        %v1349 = vmul.f32 %v1285, 1.442695
        %v1350 = vpow.pop %v1349
        %v1351 = vmul.f32 %v1286, 1.442695
        %v1352 = vpow.pop %v1351
        %v1353 = vmul.f32 %v1287, 1.442695
        %v1354 = vpow.pop %v1353
        %v1355 = vmul.f32 %v1288, 1.442695
        %v1356 = vpow.pop %v1355
        %v1357 = vmul.f32 %v1289, 1.442695
        %v1358 = vpow.pop %v1357
        %v1359 = vmul.f32 %v1290, 1.442695
        %v1360 = vpow.pop %v1359
        %v1361 = vmul.f32 %v1291, 1.442695
        %v1362 = vpow.pop %v1361
        %v1363 = vmul.f32 %v1292, 1.442695
        %v1364 = vpow.pop %v1363
        %v1365 = vmul.f32 %v1293, 1.442695
        %v1366 = vpow.pop %v1365
        %v1367 = vmul.f32 %v1294, 1.442695
        %v1368 = vpow.pop %v1367
        %v1369 = vmul.f32 %v1295, 1.442695
        %v1370 = vpow.pop %v1369
        %v1371 = vmul.f32 %v1296, 1.442695
        %v1372 = vpow.pop %v1371
        %v1373 = vmul.f32 %v1297, 1.442695
        %v1374 = vpow.pop %v1373
        %v1375 = vmul.f32 %v1298, 1.442695
        %v1376 = vpow.pop %v1375
        %v1377 = vmul.f32 %v1299, 1.442695
        %v1378 = vpow.pop %v1377
        %v1379 = vmul.f32 %v1300, 1.442695
        %v1380 = vpow.pop %v1379
        %v1381 = vmul.f32 %v1301, 1.442695
        %v1382 = vpow.pop %v1381
        %v1383 = vmul.f32 %v1302, 1.442695
        %v1384 = vpow.pop %v1383
        %v1385 = vmul.f32 %v1303, 1.442695
        %v1386 = vpow.pop %v1385
        %v1387 = vmul.f32 %v1304, 1.442695
        %v1388 = vpow.pop %v1387
        %v1389 = vmul.f32 %v1305, 1.442695
        %v1390 = vpow.pop %v1389
        %v1391 = vmul.f32 %v1306, 1.442695
        %v1392 = vpow.pop %v1391
        %v1393 = vmul.f32 %v1307, 1.442695
        %v1394 = vpow.pop %v1393
        %v1395 = vmul.f32 %v1308, 1.442695
        %v1396 = vpow.pop %v1395
        %v1397 = vmul.f32 %v1309, 1.442695
        %v1398 = vpow.pop %v1397
        %v1399 = vmul.f32 %v1310, 1.442695
        %v1400 = vpow.pop %v1399
        %v1401 = vmul.f32 %v1311, 1.442695
        %v1402 = vpow.pop %v1401
        %v1403 = vmul.f32 %v1312, 1.442695
        %v1404 = vpow.pop %v1403
        %v1405 = vmul.f32 %v1313, 1.442695
        %v1406 = vpow.pop %v1405
        %v1407 = vmul.f32 %v1314, 1.442695
        %v1408 = vpow.pop %v1407
        %v1409 = vmul.f32 %v1315, 1.442695
        %v1410 = vpow.pop %v1409
        %v1411 = vmul.f32 %v1316, 1.442695
        %v1412 = vpow.pop %v1411
        %v1413 = vmul.f32 %v1317, 1.442695
        %v1414 = vpow.pop %v1413
        %v1415 = vmul.f32 %v1318, 1.442695
        %v1416 = vpow.pop %v1415
        %v1417 = vmul.f32 %v1319, 1.442695
        %v1418 = vpow.pop %v1417
        %v1419 = vmul.f32 %v1320, 1.442695
        %v1420 = vpow.pop %v1419
        %v1421 = vmul.f32 %v1321, 1.442695
        %v1422 = vpow.pop %v1421
        %v1423 = vmul.f32 %v1322, 1.442695
        %v1424 = vpow.pop %v1423
        %v1425 = vmul.f32 %v1323, 1.442695
        %v1426 = vpow.pop %v1425
        %v1427 = vmul.f32 %v1324, 1.442695
        %v1428 = vpow.pop %v1427
        %v1429 = vmul.f32 %v1325, 1.442695
        %v1430 = vpow.pop %v1429
        %v1431 = vmul.f32 %v1326, 1.442695
        %v1432 = vpow.pop %v1431
        %v1433 = vmul.f32 %v1327, 1.442695
        %v1434 = vpow.pop %v1433
        %v1435 = vmul.f32 %v1328, 1.442695
        %v1436 = vpow.pop %v1435
        %v1437 = vmul.f32 %v1329, 1.442695
        %v1438 = vpow.pop %v1437
        %v1439 = vmul.f32 %v1330, 1.442695
        %v1440 = vpow.pop %v1439
        %v1441 = vmul.f32 %v1331, 1.442695
        %v1442 = vpow.pop %v1441
        %v1443 = vmul.f32 %v1332, 1.442695
        %v1444 = vpow.pop %v1443
        %v1445 = vmul.f32 %v1333, 1.442695
        %v1446 = vpow.pop %v1445
        %v1447 = vmul.f32 %v1334, 1.442695
        %v1448 = vpow.pop %v1447
        %v1449 = vmul.f32 %v1335, 1.442695
        %v1450 = vpow.pop %v1449
        %v1451 = vmul.f32 %v1336, 1.442695
        %v1452 = vpow.pop %v1451
        %v1453 = vmul.f32 %v1337, 1.442695
        %v1454 = vpow.pop %v1453
        %v1455 = vmul.f32 %v1338, 1.442695
        %v1456 = vpow.pop %v1455
        %v1457 = vmul.f32 %v1339, 1.442695
        %v1458 = vpow.pop %v1457
        %v1459 = vmul.f32 %v1340, 1.442695
        %v1460 = vpow.pop %v1459
        %v1461 = vmul.f32 %v1341, 1.442695
        %v1462 = vpow.pop %v1461
        %v1463 = vmul.f32 %v1342, 1.442695
        %v1464 = vpow.pop %v1463
        %v1465 = vmul.f32 %v1343, 1.442695
        %v1466 = vpow.pop %v1465
        %v1467 = vmul.f32 %v1344, 1.442695
        %v1468 = vpow.pop %v1467
        %v1469 = vmul.f32 %v1345, 1.442695
        %v1470 = vpow.pop %v1469
        %v1471 = vmul.f32 %v1346, 1.442695
        %v1472 = vpow.pop %v1471
        %v1473 = vmul.f32 %v1347, 1.442695
        %v1474 = vpow.pop %v1473
        %v1475 = vmul.f32 %v1348, 1.442695
        %v1476 = vpow.pop %v1475
        %1477 = vadd.xlane.f32.xlu0 %v1350
        %v1478 = vpop.xlane.xlu0 %1477
        %1479 = vadd.xlane.f32.xlu0 %v1352
        %v1480 = vpop.xlane.xlu0 %1479
        %1481 = vadd.xlane.f32.xlu0 %v1354
        %v1482 = vpop.xlane.xlu0 %1481
        %1483 = vadd.xlane.f32.xlu0 %v1356
        %v1484 = vpop.xlane.xlu0 %1483
        %1485 = vadd.xlane.f32.xlu0 %v1358
        %v1486 = vpop.xlane.xlu0 %1485
        %1487 = vadd.xlane.f32.xlu0 %v1360
        %v1488 = vpop.xlane.xlu0 %1487
        %1489 = vadd.xlane.f32.xlu0 %v1362
        %v1490 = vpop.xlane.xlu0 %1489
        %1491 = vadd.xlane.f32.xlu0 %v1364
        %v1492 = vpop.xlane.xlu0 %1491
        %1493 = vadd.xlane.f32.xlu0 %v1366
        %v1494 = vpop.xlane.xlu0 %1493
        %1495 = vadd.xlane.f32.xlu0 %v1368
        %v1496 = vpop.xlane.xlu0 %1495
        %1497 = vadd.xlane.f32.xlu0 %v1370
        %v1498 = vpop.xlane.xlu0 %1497
        %1499 = vadd.xlane.f32.xlu0 %v1372
        %v1500 = vpop.xlane.xlu0 %1499
        %1501 = vadd.xlane.f32.xlu0 %v1374
        %v1502 = vpop.xlane.xlu0 %1501
        %1503 = vadd.xlane.f32.xlu0 %v1376
        %v1504 = vpop.xlane.xlu0 %1503
        %1505 = vadd.xlane.f32.xlu0 %v1378
        %v1506 = vpop.xlane.xlu0 %1505
        %1507 = vadd.xlane.f32.xlu0 %v1380
        %v1508 = vpop.xlane.xlu0 %1507
        %1509 = vadd.xlane.f32.xlu0 %v1382
        %v1510 = vpop.xlane.xlu0 %1509
        %1511 = vadd.xlane.f32.xlu0 %v1384
        %v1512 = vpop.xlane.xlu0 %1511
        %1513 = vadd.xlane.f32.xlu0 %v1386
        %v1514 = vpop.xlane.xlu0 %1513
        %1515 = vadd.xlane.f32.xlu0 %v1388
        %v1516 = vpop.xlane.xlu0 %1515
        %1517 = vadd.xlane.f32.xlu0 %v1390
        %v1518 = vpop.xlane.xlu0 %1517
        %1519 = vadd.xlane.f32.xlu0 %v1392
        %v1520 = vpop.xlane.xlu0 %1519
        %1521 = vadd.xlane.f32.xlu0 %v1394
        %v1522 = vpop.xlane.xlu0 %1521
        %1523 = vadd.xlane.f32.xlu0 %v1396
        %v1524 = vpop.xlane.xlu0 %1523
        %1525 = vadd.xlane.f32.xlu0 %v1398
        %v1526 = vpop.xlane.xlu0 %1525
        %1527 = vadd.xlane.f32.xlu0 %v1400
        %v1528 = vpop.xlane.xlu0 %1527
        %1529 = vadd.xlane.f32.xlu0 %v1402
        %v1530 = vpop.xlane.xlu0 %1529
        %1531 = vadd.xlane.f32.xlu0 %v1404
        %v1532 = vpop.xlane.xlu0 %1531
        %1533 = vadd.xlane.f32.xlu0 %v1406
        %v1534 = vpop.xlane.xlu0 %1533
        %1535 = vadd.xlane.f32.xlu0 %v1408
        %v1536 = vpop.xlane.xlu0 %1535
        %1537 = vadd.xlane.f32.xlu0 %v1410
        %v1538 = vpop.xlane.xlu0 %1537
        %1539 = vadd.xlane.f32.xlu0 %v1412
        %v1540 = vpop.xlane.xlu0 %1539
        %1541 = vadd.xlane.f32.xlu0 %v1414
        %v1542 = vpop.xlane.xlu0 %1541
        %1543 = vadd.xlane.f32.xlu0 %v1416
        %v1544 = vpop.xlane.xlu0 %1543
        %1545 = vadd.xlane.f32.xlu0 %v1418
        %v1546 = vpop.xlane.xlu0 %1545
        %1547 = vadd.xlane.f32.xlu0 %v1420
        %v1548 = vpop.xlane.xlu0 %1547
        %1549 = vadd.xlane.f32.xlu0 %v1422
        %v1550 = vpop.xlane.xlu0 %1549
        %1551 = vadd.xlane.f32.xlu0 %v1424
        %v1552 = vpop.xlane.xlu0 %1551
        %1553 = vadd.xlane.f32.xlu0 %v1426
        %v1554 = vpop.xlane.xlu0 %1553
        %1555 = vadd.xlane.f32.xlu0 %v1428
        %v1556 = vpop.xlane.xlu0 %1555
        %1557 = vadd.xlane.f32.xlu0 %v1430
        %v1558 = vpop.xlane.xlu0 %1557
        %1559 = vadd.xlane.f32.xlu0 %v1432
        %v1560 = vpop.xlane.xlu0 %1559
        %1561 = vadd.xlane.f32.xlu0 %v1434
        %v1562 = vpop.xlane.xlu0 %1561
        %1563 = vadd.xlane.f32.xlu0 %v1436
        %v1564 = vpop.xlane.xlu0 %1563
        %1565 = vadd.xlane.f32.xlu0 %v1438
        %v1566 = vpop.xlane.xlu0 %1565
        %1567 = vadd.xlane.f32.xlu0 %v1440
        %v1568 = vpop.xlane.xlu0 %1567
        %1569 = vadd.xlane.f32.xlu0 %v1442
        %v1570 = vpop.xlane.xlu0 %1569
        %1571 = vadd.xlane.f32.xlu0 %v1444
        %v1572 = vpop.xlane.xlu0 %1571
        %1573 = vadd.xlane.f32.xlu0 %v1446
        %v1574 = vpop.xlane.xlu0 %1573
        %1575 = vadd.xlane.f32.xlu0 %v1448
        %v1576 = vpop.xlane.xlu0 %1575
        %1577 = vadd.xlane.f32.xlu0 %v1450
        %v1578 = vpop.xlane.xlu0 %1577
        %1579 = vadd.xlane.f32.xlu0 %v1452
        %v1580 = vpop.xlane.xlu0 %1579
        %1581 = vadd.xlane.f32.xlu0 %v1454
        %v1582 = vpop.xlane.xlu0 %1581
        %1583 = vadd.xlane.f32.xlu0 %v1456
        %v1584 = vpop.xlane.xlu0 %1583
        %1585 = vadd.xlane.f32.xlu0 %v1458
        %v1586 = vpop.xlane.xlu0 %1585
        %1587 = vadd.xlane.f32.xlu0 %v1460
        %v1588 = vpop.xlane.xlu0 %1587
        %1589 = vadd.xlane.f32.xlu0 %v1462
        %v1590 = vpop.xlane.xlu0 %1589
        %1591 = vadd.xlane.f32.xlu0 %v1464
        %v1592 = vpop.xlane.xlu0 %1591
        %1593 = vadd.xlane.f32.xlu0 %v1466
        %v1594 = vpop.xlane.xlu0 %1593
        %1595 = vadd.xlane.f32.xlu0 %v1468
        %v1596 = vpop.xlane.xlu0 %1595
        %1597 = vadd.xlane.f32.xlu0 %v1470
        %v1598 = vpop.xlane.xlu0 %1597
        %1599 = vadd.xlane.f32.xlu0 %v1472
        %v1600 = vpop.xlane.xlu0 %1599
        %1601 = vadd.xlane.f32.xlu0 %v1474
        %v1602 = vpop.xlane.xlu0 %1601
        %1603 = vadd.xlane.f32.xlu0 %v1476
        %v1604 = vpop.xlane.xlu0 %1603
        %v1605 = vrcp.pop %v1478
        %v1606 = vrcp.pop %v1480
        %v1607 = vrcp.pop %v1482
        %v1608 = vrcp.pop %v1484
        %v1609 = vrcp.pop %v1486
        %v1610 = vrcp.pop %v1488
        %v1611 = vrcp.pop %v1490
        %v1612 = vrcp.pop %v1492
        %v1613 = vrcp.pop %v1494
        %v1614 = vrcp.pop %v1496
        %v1615 = vrcp.pop %v1498
        %v1616 = vrcp.pop %v1500
        %v1617 = vrcp.pop %v1502
        %v1618 = vrcp.pop %v1504
        %v1619 = vrcp.pop %v1506
        %v1620 = vrcp.pop %v1508
        %v1621 = vrcp.pop %v1510
        %v1622 = vrcp.pop %v1512
        %v1623 = vrcp.pop %v1514
        %v1624 = vrcp.pop %v1516
        %v1625 = vrcp.pop %v1518
        %v1626 = vrcp.pop %v1520
        %v1627 = vrcp.pop %v1522
        %v1628 = vrcp.pop %v1524
        %v1629 = vrcp.pop %v1526
        %v1630 = vrcp.pop %v1528
        %v1631 = vrcp.pop %v1530
        %v1632 = vrcp.pop %v1532
        %v1633 = vrcp.pop %v1534
        %v1634 = vrcp.pop %v1536
        %v1635 = vrcp.pop %v1538
        %v1636 = vrcp.pop %v1540
        %v1637 = vrcp.pop %v1542
        %v1638 = vrcp.pop %v1544
        %v1639 = vrcp.pop %v1546
        %v1640 = vrcp.pop %v1548
        %v1641 = vrcp.pop %v1550
        %v1642 = vrcp.pop %v1552
        %v1643 = vrcp.pop %v1554
        %v1644 = vrcp.pop %v1556
        %v1645 = vrcp.pop %v1558
        %v1646 = vrcp.pop %v1560
        %v1647 = vrcp.pop %v1562
        %v1648 = vrcp.pop %v1564
        %v1649 = vrcp.pop %v1566
        %v1650 = vrcp.pop %v1568
        %v1651 = vrcp.pop %v1570
        %v1652 = vrcp.pop %v1572
        %v1653 = vrcp.pop %v1574
        %v1654 = vrcp.pop %v1576
        %v1655 = vrcp.pop %v1578
        %v1656 = vrcp.pop %v1580
        %v1657 = vrcp.pop %v1582
        %v1658 = vrcp.pop %v1584
        %v1659 = vrcp.pop %v1586
        %v1660 = vrcp.pop %v1588
        %v1661 = vrcp.pop %v1590
        %v1662 = vrcp.pop %v1592
        %v1663 = vrcp.pop %v1594
        %v1664 = vrcp.pop %v1596
        %v1665 = vrcp.pop %v1598
        %v1666 = vrcp.pop %v1600
        %v1667 = vrcp.pop %v1602
        %v1668 = vrcp.pop %v1604
        %v1669 = vmul.f32 %v1350, %v1605
        %v1670 = vmul.f32 %v1352, %v1606
        %v1671 = vmul.f32 %v1354, %v1607
        %v1672 = vmul.f32 %v1356, %v1608
        %v1673 = vmul.f32 %v1358, %v1609
        %v1674 = vmul.f32 %v1360, %v1610
        %v1675 = vmul.f32 %v1362, %v1611
        %v1676 = vmul.f32 %v1364, %v1612
        %v1677 = vmul.f32 %v1366, %v1613
        %v1678 = vmul.f32 %v1368, %v1614
        %v1679 = vmul.f32 %v1370, %v1615
        %v1680 = vmul.f32 %v1372, %v1616
        %v1681 = vmul.f32 %v1374, %v1617
        %v1682 = vmul.f32 %v1376, %v1618
        %v1683 = vmul.f32 %v1378, %v1619
        %v1684 = vmul.f32 %v1380, %v1620
        %v1685 = vmul.f32 %v1382, %v1621
        %v1686 = vmul.f32 %v1384, %v1622
        %v1687 = vmul.f32 %v1386, %v1623
        %v1688 = vmul.f32 %v1388, %v1624
        %v1689 = vmul.f32 %v1390, %v1625
        %v1690 = vmul.f32 %v1392, %v1626
        %v1691 = vmul.f32 %v1394, %v1627
        %v1692 = vmul.f32 %v1396, %v1628
        %v1693 = vmul.f32 %v1398, %v1629
        %v1694 = vmul.f32 %v1400, %v1630
        %v1695 = vmul.f32 %v1402, %v1631
        %v1696 = vmul.f32 %v1404, %v1632
        %v1697 = vmul.f32 %v1406, %v1633
        %v1698 = vmul.f32 %v1408, %v1634
        %v1699 = vmul.f32 %v1410, %v1635
        %v1700 = vmul.f32 %v1412, %v1636
        %v1701 = vmul.f32 %v1414, %v1637
        %v1702 = vmul.f32 %v1416, %v1638
        %v1703 = vmul.f32 %v1418, %v1639
        %v1704 = vmul.f32 %v1420, %v1640
        %v1705 = vmul.f32 %v1422, %v1641
        %v1706 = vmul.f32 %v1424, %v1642
        %v1707 = vmul.f32 %v1426, %v1643
        %v1708 = vmul.f32 %v1428, %v1644
        %v1709 = vmul.f32 %v1430, %v1645
        %v1710 = vmul.f32 %v1432, %v1646
        %v1711 = vmul.f32 %v1434, %v1647
        %v1712 = vmul.f32 %v1436, %v1648
        %v1713 = vmul.f32 %v1438, %v1649
        %v1714 = vmul.f32 %v1440, %v1650
        %v1715 = vmul.f32 %v1442, %v1651
        %v1716 = vmul.f32 %v1444, %v1652
        %v1717 = vmul.f32 %v1446, %v1653
        %v1718 = vmul.f32 %v1448, %v1654
        %v1719 = vmul.f32 %v1450, %v1655
        %v1720 = vmul.f32 %v1452, %v1656
        %v1721 = vmul.f32 %v1454, %v1657
        %v1722 = vmul.f32 %v1456, %v1658
        %v1723 = vmul.f32 %v1458, %v1659
        %v1724 = vmul.f32 %v1460, %v1660
        %v1725 = vmul.f32 %v1462, %v1661
        %v1726 = vmul.f32 %v1464, %v1662
        %v1727 = vmul.f32 %v1466, %v1663
        %v1728 = vmul.f32 %v1468, %v1664
        %v1729 = vmul.f32 %v1470, %v1665
        %v1730 = vmul.f32 %v1472, %v1666
        %v1731 = vmul.f32 %v1474, %v1667
        %v1732 = vmul.f32 %v1476, %v1668
        %1733 = vst [vmem:[%s191] sm:$0xff] %v1669
        %1734 = vst [vmem:[%s191 + $0x8] sm:$0xff] %v1670
        %1735 = vst [vmem:[%s191 + $0x10] sm:$0xff] %v1671
        %1736 = vst [vmem:[%s191 + $0x18] sm:$0xff] %v1672
        %1737 = vst [vmem:[%s191 + $0x20] sm:$0xff] %v1673
        %1738 = vst [vmem:[%s191 + $0x28] sm:$0xff] %v1674
        %1739 = vst [vmem:[%s191 + $0x30] sm:$0xff] %v1675
        %1740 = vst [vmem:[%s191 + $0x38] sm:$0xff] %v1676
        %1741 = vst [vmem:[%s191 + $0x40] sm:$0xff] %v1677
        %1742 = vst [vmem:[%s191 + $0x48] sm:$0xff] %v1678
        %1743 = vst [vmem:[%s191 + $0x50] sm:$0xff] %v1679
        %1744 = vst [vmem:[%s191 + $0x58] sm:$0xff] %v1680
        %1745 = vst [vmem:[%s191 + $0x60] sm:$0xff] %v1681
        %1746 = vst [vmem:[%s191 + $0x68] sm:$0xff] %v1682
        %1747 = vst [vmem:[%s191 + $0x70] sm:$0xff] %v1683
        %1748 = vst [vmem:[%s191 + $0x78] sm:$0xff] %v1684
        %1749 = vst [vmem:[%s191 + $0x80] sm:$0xff] %v1685
        %1750 = vst [vmem:[%s191 + $0x88] sm:$0xff] %v1686
        %1751 = vst [vmem:[%s191 + $0x90] sm:$0xff] %v1687
        %1752 = vst [vmem:[%s191 + $0x98] sm:$0xff] %v1688
        %1753 = vst [vmem:[%s191 + $0xa0] sm:$0xff] %v1689
        %1754 = vst [vmem:[%s191 + $0xa8] sm:$0xff] %v1690
        %1755 = vst [vmem:[%s191 + $0xb0] sm:$0xff] %v1691
        %1756 = vst [vmem:[%s191 + $0xb8] sm:$0xff] %v1692
        %1757 = vst [vmem:[%s191 + $0xc0] sm:$0xff] %v1693
        %1758 = vst [vmem:[%s191 + $0xc8] sm:$0xff] %v1694
        %1759 = vst [vmem:[%s191 + $0xd0] sm:$0xff] %v1695
        %1760 = vst [vmem:[%s191 + $0xd8] sm:$0xff] %v1696
        %1761 = vst [vmem:[%s191 + $0xe0] sm:$0xff] %v1697
        %1762 = vst [vmem:[%s191 + $0xe8] sm:$0xff] %v1698
        %1763 = vst [vmem:[%s191 + $0xf0] sm:$0xff] %v1699
        %1764 = vst [vmem:[%s191 + $0xf8] sm:$0xff] %v1700
        %1765 = vst [vmem:[%s191 + $0x100] sm:$0xff] %v1701
        %1766 = vst [vmem:[%s191 + $0x108] sm:$0xff] %v1702
        %1767 = vst [vmem:[%s191 + $0x110] sm:$0xff] %v1703
        %1768 = vst [vmem:[%s191 + $0x118] sm:$0xff] %v1704
        %1769 = vst [vmem:[%s191 + $0x120] sm:$0xff] %v1705
        %1770 = vst [vmem:[%s191 + $0x128] sm:$0xff] %v1706
        %1771 = vst [vmem:[%s191 + $0x130] sm:$0xff] %v1707
        %1772 = vst [vmem:[%s191 + $0x138] sm:$0xff] %v1708
        %1773 = vst [vmem:[%s191 + $0x140] sm:$0xff] %v1709
        %1774 = vst [vmem:[%s191 + $0x148] sm:$0xff] %v1710
        %1775 = vst [vmem:[%s191 + $0x150] sm:$0xff] %v1711
        %1776 = vst [vmem:[%s191 + $0x158] sm:$0xff] %v1712
        %1777 = vst [vmem:[%s191 + $0x160] sm:$0xff] %v1713
        %1778 = vst [vmem:[%s191 + $0x168] sm:$0xff] %v1714
        %1779 = vst [vmem:[%s191 + $0x170] sm:$0xff] %v1715
        %1780 = vst [vmem:[%s191 + $0x178] sm:$0xff] %v1716
        %1781 = vst [vmem:[%s191 + $0x180] sm:$0xff] %v1717
        %1782 = vst [vmem:[%s191 + $0x188] sm:$0xff] %v1718
        %1783 = vst [vmem:[%s191 + $0x190] sm:$0xff] %v1719
        %1784 = vst [vmem:[%s191 + $0x198] sm:$0xff] %v1720
        %1785 = vst [vmem:[%s191 + $0x1a0] sm:$0xff] %v1721
        %1786 = vst [vmem:[%s191 + $0x1a8] sm:$0xff] %v1722
        %1787 = vst [vmem:[%s191 + $0x1b0] sm:$0xff] %v1723
        %1788 = vst [vmem:[%s191 + $0x1b8] sm:$0xff] %v1724
        %1789 = vst [vmem:[%s191 + $0x1c0] sm:$0xff] %v1725
        %1790 = vst [vmem:[%s191 + $0x1c8] sm:$0xff] %v1726
        %1791 = vst [vmem:[%s191 + $0x1d0] sm:$0xff] %v1727
        %1792 = vst [vmem:[%s191 + $0x1d8] sm:$0xff] %v1728
        %1793 = vst [vmem:[%s191 + $0x1e0] sm:$0xff] %v1729
        %1794 = vst [vmem:[%s191 + $0x1e8] sm:$0xff] %v1730
        %1795 = vst [vmem:[%s191 + $0x1f0] sm:$0xff] %v1731
        %1796 = vst [vmem:[%s191 + $0x1f8] sm:$0xff] %v1732
        %s1797 = sand.u32 %s115, 1
        %s1798 = scalar_lea.sflag [#allocation3], %s1797
        %s1799 = sand.u32 %s115, 1
        %s1800 = smul.addr %s1799, 512
        %s1801 = scalar_lea.vmem [#allocation2], %s1800
        // Predicated region
        $region37: #{tpu_custom_call.1} parent=35 // pred_check
          %p1802 = pneg %p125
        $region38: #{tpu_custom_call.1} parent=35 // pred_check_branch
          %1804 = sbr.rel (%p1802) target = $region40
        $region39: #{tpu_custom_call.1} parent=35 // pred_region
          %s1805 = smul.u32 64, %s18
          %s1807 = ssub.s32 8192, 8192
          %1808 = vsyncadd %s1798, %s1807
          %s1809 = smul.addr %s1805, 128
          %s1810 = scalar_lea.hbm %s4, %s1809
          %s1811 = sshll.u32 %s1801, 4
          %s1812 = int_to_ptr.vmem [resolvable:$true] %s1811
          %1817 = dma.vmem_to_hbm [thread:$0]  %s1812, 8192, %s1810, %s1798, 128, 128, 8
        $region40: #{tpu_custom_call.1} parent=35 // pred_fallthru
          _
      $region36: #{tpu_custom_call.1} parent=5 // pred_fallthru
        _
      %p1818 = scmp.le.s32.totalorder 2, %s13
      // Predicated region
      $region41: #{tpu_custom_call.1} parent=5 // pred_check
        %p1819 = pneg %p1818
      $region42: #{tpu_custom_call.1} parent=5 // pred_check_branch
        %1821 = sbr.rel (%p1819) target = $region44
      $region43: #{tpu_custom_call.1} parent=5 // pred_region
        %s1822 = ssub.s32 %s13, 2
        // Predicated region
        $region45: #{tpu_custom_call.1} parent=43 // pred_check
          %p1823 = pneg %p131
        $region46: #{tpu_custom_call.1} parent=43 // pred_check_branch
          %1825 = sbr.rel (%p1823) target = $region48
        $region47: #{tpu_custom_call.1} parent=43 // pred_region
          %s1826 = sand.u32 %s116, 1
          %s1827 = scalar_lea.sflag [#allocation3], %s1826
          %s1828 = sand.u32 %s116, 1
          %s1829 = smul.addr %s1828, 512
          %s1830 = scalar_lea.vmem [#allocation2], %s1829
          %1831 = dma.done %s1827, 8192
        $region48: #{tpu_custom_call.1} parent=43 // pred_fallthru
          _
      $region44: #{tpu_custom_call.1} parent=5 // pred_fallthru
        _
    $region6: #{tpu_custom_call.1} parent=1 // loop_footer
      %s17 = sadd.s32 1, %s13
    $region7: #{tpu_custom_call.1} parent=1 // loop_footer_branch
      %12 = sbr.rel target = $region3
    $region8: #{tpu_custom_call.1} parent=1 // loop_exit
      _
    %1832 = vsyncpa [#allocation3], 1
    %s1833 = scalar_lea.sflag [#allocation3], 1
    %1834 = vsyncpa %s1833, 1

</llo_original>
